<compile_context>
chip_gen: v7x
topology: tpu7x:2x2x1
jax: 0.10.0
libtpu: 0.0.40
codegen_flags: <defaults>
</compile_context>

<pallas_src>
import functools

import jax
import jax.numpy as jnp
from jax.experimental import pallas as pl
from jax.experimental.pallas import tpu as pltpu


def _packed_mlp_logsoftmax_kernel(num_hidden, groups, out_size, *refs):
    """refs = x_ref, (w0, b0), ..., (w_{L-1}, b_{L-1}), w_final, b_final, out_ref.

    x_ref:   [G*H, ct]   bf16  -- G batch groups stacked on sublanes, batch on lanes
    w_i:     [G*H, G*H]  bf16  -- block-diagonal packed hidden weight
    b_i:     [G*H, 1]    f32
    w_final: [G*O, G*H]  bf16
    b_final: [G*O, 1]    f32
    out_ref: [G, O, ct]  (out_dtype) -- per-group log-probs, classes on axis 1
    """
    x_ref = refs[0]
    out_ref = refs[-1]
    param_refs = refs[1:-1]

    h = x_ref[...]                                     # [G*H, ct] bf16

    # Hidden layers: Linear + ReLU (statically unrolled; num_hidden is a
    # Python constant).  Dropout is identity in eval mode.
    for i in range(num_hidden):
        w = param_refs[2 * i][...]                     # [G*H, G*H] bf16
        b = param_refs[2 * i + 1][...]                 # [G*H, 1]   f32
        z = jnp.dot(w, h, preferred_element_type=jnp.float32) + b
        h = jnp.maximum(z, 0.0).astype(jnp.bfloat16)   # ReLU, back to bf16 for MXU

    # Final projection to G*O packed logits.
    w_f = param_refs[-2][...]                          # [G*O, G*H] bf16
    b_f = param_refs[-1][...]                          # [G*O, 1]   f32
    logits = jnp.dot(w_f, h, preferred_element_type=jnp.float32) + b_f   # [G*O, ct]

    # Per-group numerically-stable LogSoftmax along the class axis.
    # out_size == 8 == the f32 sublane tile, so this reshape is layout-free.
    ct = logits.shape[-1]
    lp = logits.reshape(groups, out_size, ct)          # [G, O, ct]
    m = jnp.max(lp, axis=1, keepdims=True)
    s = lp - m
    lse = jnp.log(jnp.sum(jnp.exp(s), axis=1, keepdims=True))
    out_ref[...] = (s - lse).astype(out_ref.dtype)


def _round_up(x, m):
    return ((x + m - 1) // m) * m


@functools.partial(jax.jit, static_argnames=("groups", "col_tile", "out_dtype"))
def relation_classifier_forward(x, hidden_ws, hidden_bs, w_final, b_final,
                                *, groups=8, col_tile=2048,
                                out_dtype=jnp.float32):
    """x: [B, H] float32.  hidden_ws[i]: [H, H] (PyTorch [out, in]); hidden_bs[i]: [H].
    w_final: [O, H]; b_final: [O].  Returns log-probs [B, O]."""
    B, H = x.shape
    O = w_final.shape[0]
    num_hidden = len(hidden_ws)
    G = int(groups)
    LANE = 128

    Hp, Op = G * H, G * O

    # Packed-column geometry: each packed column carries G batch rows.
    cols_needed = -(-B // G)                                      # ceil(B / G)
    ct = max(LANE, min(int(col_tile), _round_up(cols_needed, LANE)))
    ct = _round_up(ct, LANE)
    Cp = _round_up(cols_needed, ct)                               # packed columns
    Bp = Cp * G                                                   # padded batch
    grid_len = Cp // ct

    # ---- pack input: [B,H] f32 -> [G*H, Cp] bf16 (fused by XLA under jit) ----
    xb = x.astype(jnp.bfloat16)
    if Bp != B:
        xb = jnp.pad(xb, ((0, Bp - B), (0, 0)))                   # padded rows -> 0
    x_pack = xb.reshape(G, Cp, H).transpose(0, 2, 1).reshape(Hp, Cp)

    # ---- block-diagonal packed parameters (tiny; built once per trace) ----
    eye = jnp.eye(G, dtype=jnp.float32)
    params = []
    for w, b in zip(hidden_ws, hidden_bs):
        params.append(jnp.kron(eye, w.astype(jnp.float32)).astype(jnp.bfloat16))   # [Hp, Hp]
        params.append(jnp.tile(b.astype(jnp.float32), G).reshape(Hp, 1))           # [Hp, 1]
    params.append(jnp.kron(eye, w_final.astype(jnp.float32)).astype(jnp.bfloat16))  # [Op, Hp]
    params.append(jnp.tile(b_final.astype(jnp.float32), G).reshape(Op, 1))          # [Op, 1]

    # Block-index-invariant full-array blocks for the (small) parameters.
    param_specs = [pl.BlockSpec(tuple(p.shape), lambda i: (0, 0)) for p in params]

    param_bytes = sum(int(p.size) * p.dtype.itemsize for p in params)
    out_itemsize = jnp.dtype(out_dtype).itemsize
    cost = pl.CostEstimate(
        flops=int(2 * Cp * (num_hidden * Hp * Hp + Hp * Op)),     # dense packed flops
        transcendentals=int(Bp * (O + 1)),                        # exp per class + log per row
        bytes_accessed=int(Cp * Hp * 2 + Cp * Op * out_itemsize + param_bytes),
    )

    kernel = functools.partial(_packed_mlp_logsoftmax_kernel, num_hidden, G, O)

    out_pack = pl.pallas_call(
        kernel,
        out_shape=jax.ShapeDtypeStruct((G, O, Cp), out_dtype),
        grid_spec=pltpu.PrefetchScalarGridSpec(
            num_scalar_prefetch=0,
            grid=(grid_len,),
            in_specs=[pl.BlockSpec((Hp, ct), lambda i: (0, i))] + param_specs,
            out_specs=pl.BlockSpec((G, O, ct), lambda i: (0, 0, i)),
        ),
        compiler_params=pltpu.CompilerParams(
            dimension_semantics=("parallel",),
            vmem_limit_bytes=32 * 1024 * 1024,
        ),
        cost_estimate=cost,
    )(x_pack, *params)

    # ---- unpack: [G, O, Cp] -> [Bp, O] -> [B, O] (fused with consumer under jit) ----
    out = out_pack.transpose(0, 2, 1).reshape(Bp, O)[:B]
    return out


def init_params(key, num_layers, hidden_size, output_size):
    """Deterministic synthetic parameters in native PyTorch nn.Linear layout:
    W [out, in], b [out]."""
    hidden_ws, hidden_bs = [], []
    for _ in range(num_layers):
        key, kw, kb = jax.random.split(key, 3)
        w = jax.random.normal(kw, (hidden_size, hidden_size), jnp.float32) * 0.1
        b = jax.random.normal(kb, (hidden_size,), jnp.float32) * 0.01
        hidden_ws.append(w)
        hidden_bs.append(b)
    key, kw, kb = jax.random.split(key, 3)
    w_final = jax.random.normal(kw, (output_size, hidden_size), jnp.float32) * 0.1
    b_final = jax.random.normal(kb, (output_size,), jnp.float32) * 0.01
    return hidden_ws, hidden_bs, w_final, b_final


if __name__ == "__main__":
    num_layers = 2
    hidden_size = 32
    output_size = 8
    batch = 8

    key = jax.random.PRNGKey(0)
    key, kx = jax.random.split(key)
    x = jax.random.normal(kx, (batch, hidden_size), jnp.float32)

    hidden_ws, hidden_bs, w_final, b_final = init_params(
        key, num_layers, hidden_size, output_size)

    out = relation_classifier_forward(x, hidden_ws, hidden_bs, w_final, b_final)
    out = jax.block_until_ready(out)

    # Pure-JAX reference using the same bf16 weight/activation casts as the
    # kernel (eval-mode dropout = identity, no batch norm).  Block-diagonal
    # packing adds only exact-zero terms, so results match the unpacked math.
    hT = x.T.astype(jnp.bfloat16)
    for w, b in zip(hidden_ws, hidden_bs):
        z = jnp.dot(w.astype(jnp.bfloat16), hT,
                    preferred_element_type=jnp.float32) + b[:, None]
        hT = jnp.maximum(z, 0.0).astype(jnp.bfloat16)
    logits = jnp.dot(w_final.astype(jnp.bfloat16), hT,
                     preferred_element_type=jnp.float32) + b_final[:, None]
    ref = jax.nn.log_softmax(logits, axis=0).T

    assert out.shape == (batch, output_size)
    assert jnp.allclose(out, ref, atol=2e-3, rtol=2e-3), "mismatch vs reference"

    print("KERNEL_OK")
</pallas_src>

<mosaic_0001>
module attributes {stable_mosaic.version = 11 : i64} {
  func.func @_packed_mlp_logsoftmax_kernel(%arg0: i32, %arg1: memref<256x128xbf16, #tpu.memory_space<vmem>>, %arg2: memref<256x256xbf16, #tpu.memory_space<vmem>>, %arg3: memref<256x1xf32, #tpu.memory_space<vmem>>, %arg4: memref<256x256xbf16, #tpu.memory_space<vmem>>, %arg5: memref<256x1xf32, #tpu.memory_space<vmem>>, %arg6: memref<64x256xbf16, #tpu.memory_space<vmem>>, %arg7: memref<64x1xf32, #tpu.memory_space<vmem>>, %arg8: memref<8x8x128xf32, #tpu.memory_space<vmem>>) attributes {dimension_semantics = [#tpu.dimension_semantics<parallel>], iteration_bounds = array<i64: 1>, scalar_prefetch = 0 : i64, scratch_operands = 0 : i64, tpu.core_type = #tpu.core_type<tc>, window_params = [{transform_indices = @transform_0, window_bounds = array<i64: 256, 128>}, {pipeline_mode = #tpu.pipeline_mode<synchronous>, transform_indices = @transform_1, window_bounds = array<i64: 256, 256>}, {pipeline_mode = #tpu.pipeline_mode<synchronous>, transform_indices = @transform_2, window_bounds = array<i64: 256, 1>}, {pipeline_mode = #tpu.pipeline_mode<synchronous>, transform_indices = @transform_3, window_bounds = array<i64: 256, 256>}, {pipeline_mode = #tpu.pipeline_mode<synchronous>, transform_indices = @transform_4, window_bounds = array<i64: 256, 1>}, {pipeline_mode = #tpu.pipeline_mode<synchronous>, transform_indices = @transform_5, window_bounds = array<i64: 64, 256>}, {pipeline_mode = #tpu.pipeline_mode<synchronous>, transform_indices = @transform_6, window_bounds = array<i64: 64, 1>}, {transform_indices = @transform_7, window_bounds = array<i64: 8, 8, 128>}]} {
    %c0 = arith.constant 0 : index
    %c0_0 = arith.constant 0 : index
    %0 = vector.load %arg1[%c0, %c0_0] : memref<256x128xbf16, #tpu.memory_space<vmem>>, vector<256x128xbf16>
    %c0_1 = arith.constant 0 : index
    %c0_2 = arith.constant 0 : index
    %1 = vector.load %arg2[%c0_1, %c0_2] : memref<256x256xbf16, #tpu.memory_space<vmem>>, vector<256x256xbf16>
    %c0_3 = arith.constant 0 : index
    %c0_4 = arith.constant 0 : index
    %2 = vector.load %arg3[%c0_3, %c0_4] : memref<256x1xf32, #tpu.memory_space<vmem>>, vector<256x1xf32>
    %cst = arith.constant dense<0.000000e+00> : vector<256x128xf32>
    %3 = tpu.matmul %1, %0, %cst {dimension_numbers = #tpu.dot_dimension_numbers<[1], [0], [0], [1], [0, 0, 1, 1], [], []>} : vector<256x256xbf16>, vector<256x128xbf16>, vector<256x128xf32> -> vector<256x128xf32>
    %4 = vector.broadcast %2 : vector<256x1xf32> to vector<256x128xf32>
    %5 = arith.addf %3, %4 : vector<256x128xf32>
    %cst_5 = arith.constant 0.000000e+00 : f32
    %6 = vector.broadcast %cst_5 : f32 to vector<256x128xf32>
    %7 = arith.maximumf %5, %6 : vector<256x128xf32>
    %8 = arith.truncf %7 : vector<256x128xf32> to vector<256x128xbf16>
    %c0_6 = arith.constant 0 : index
    %c0_7 = arith.constant 0 : index
    %9 = vector.load %arg4[%c0_6, %c0_7] : memref<256x256xbf16, #tpu.memory_space<vmem>>, vector<256x256xbf16>
    %c0_8 = arith.constant 0 : index
    %c0_9 = arith.constant 0 : index
    %10 = vector.load %arg5[%c0_8, %c0_9] : memref<256x1xf32, #tpu.memory_space<vmem>>, vector<256x1xf32>
    %cst_10 = arith.constant dense<0.000000e+00> : vector<256x128xf32>
    %11 = tpu.matmul %9, %8, %cst_10 {dimension_numbers = #tpu.dot_dimension_numbers<[1], [0], [0], [1], [0, 0, 1, 1], [], []>} : vector<256x256xbf16>, vector<256x128xbf16>, vector<256x128xf32> -> vector<256x128xf32>
    %12 = vector.broadcast %10 : vector<256x1xf32> to vector<256x128xf32>
    %13 = arith.addf %11, %12 : vector<256x128xf32>
    %cst_11 = arith.constant 0.000000e+00 : f32
    %14 = vector.broadcast %cst_11 : f32 to vector<256x128xf32>
    %15 = arith.maximumf %13, %14 : vector<256x128xf32>
    %16 = arith.truncf %15 : vector<256x128xf32> to vector<256x128xbf16>
    %c0_12 = arith.constant 0 : index
    %c0_13 = arith.constant 0 : index
    %17 = vector.load %arg6[%c0_12, %c0_13] : memref<64x256xbf16, #tpu.memory_space<vmem>>, vector<64x256xbf16>
    %c0_14 = arith.constant 0 : index
    %c0_15 = arith.constant 0 : index
    %18 = vector.load %arg7[%c0_14, %c0_15] : memref<64x1xf32, #tpu.memory_space<vmem>>, vector<64x1xf32>
    %cst_16 = arith.constant dense<0.000000e+00> : vector<64x128xf32>
    %19 = tpu.matmul %17, %16, %cst_16 {dimension_numbers = #tpu.dot_dimension_numbers<[1], [0], [0], [1], [0, 0, 1, 1], [], []>} : vector<64x256xbf16>, vector<256x128xbf16>, vector<64x128xf32> -> vector<64x128xf32>
    %20 = vector.broadcast %18 : vector<64x1xf32> to vector<64x128xf32>
    %21 = arith.addf %19, %20 : vector<64x128xf32>
    %22 = vector.shape_cast %21 : vector<64x128xf32> to vector<8x8x128xf32>
    %cst_17 = arith.constant dense<0xFF800000> : vector<8x128xf32>
    %23 = vector.multi_reduction <maximumf>, %22, %cst_17 [1] : vector<8x8x128xf32> to vector<8x128xf32>
    %24 = vector.shape_cast %23 : vector<8x128xf32> to vector<8x1x128xf32>
    %25 = vector.broadcast %24 : vector<8x1x128xf32> to vector<8x8x128xf32>
    %26 = arith.subf %22, %25 : vector<8x8x128xf32>
    %27 = math.exp %26 : vector<8x8x128xf32>
    %cst_18 = arith.constant dense<0.000000e+00> : vector<8x128xf32>
    %28 = vector.multi_reduction <add>, %27, %cst_18 [1] : vector<8x8x128xf32> to vector<8x128xf32>
    %29 = vector.shape_cast %28 : vector<8x128xf32> to vector<8x1x128xf32>
    %30 = math.log %29 : vector<8x1x128xf32>
    %31 = vector.broadcast %30 : vector<8x1x128xf32> to vector<8x8x128xf32>
    %32 = arith.subf %26, %31 : vector<8x8x128xf32>
    %c0_19 = arith.constant 0 : index
    %c0_20 = arith.constant 0 : index
    %c0_21 = arith.constant 0 : index
    %33 = vector.load %arg8[%c0_19, %c0_20, %c0_21] : memref<8x8x128xf32, #tpu.memory_space<vmem>>, vector<8x8x128xf32>
    tpu.vector_store %arg8[%c0_19, %c0_20, %c0_21], %32 {strides = array<i32>} : memref<8x8x128xf32, #tpu.memory_space<vmem>>, vector<8x8x128xf32>,
    return
  }
  func.func @transform_0(%arg0: i32) -> (i32, i32) {
    %c0_i32 = arith.constant 0 : i32
    %c0_i32_0 = arith.constant 0 : i32
    return %c0_i32, %arg0 : i32, i32
  }
  func.func @transform_1(%arg0: i32) -> (i32, i32) {
    %c0_i32 = arith.constant 0 : i32
    %c0_i32_0 = arith.constant 0 : i32
    %c0_i32_1 = arith.constant 0 : i32
    return %c0_i32, %c0_i32_0 : i32, i32
  }
  func.func @transform_2(%arg0: i32) -> (i32, i32) {
    %c0_i32 = arith.constant 0 : i32
    %c0_i32_0 = arith.constant 0 : i32
    %c0_i32_1 = arith.constant 0 : i32
    return %c0_i32, %c0_i32_0 : i32, i32
  }
  func.func @transform_3(%arg0: i32) -> (i32, i32) {
    %c0_i32 = arith.constant 0 : i32
    %c0_i32_0 = arith.constant 0 : i32
    %c0_i32_1 = arith.constant 0 : i32
    return %c0_i32, %c0_i32_0 : i32, i32
  }
  func.func @transform_4(%arg0: i32) -> (i32, i32) {
    %c0_i32 = arith.constant 0 : i32
    %c0_i32_0 = arith.constant 0 : i32
    %c0_i32_1 = arith.constant 0 : i32
    return %c0_i32, %c0_i32_0 : i32, i32
  }
  func.func @transform_5(%arg0: i32) -> (i32, i32) {
    %c0_i32 = arith.constant 0 : i32
    %c0_i32_0 = arith.constant 0 : i32
    %c0_i32_1 = arith.constant 0 : i32
    return %c0_i32, %c0_i32_0 : i32, i32
  }
  func.func @transform_6(%arg0: i32) -> (i32, i32) {
    %c0_i32 = arith.constant 0 : i32
    %c0_i32_0 = arith.constant 0 : i32
    %c0_i32_1 = arith.constant 0 : i32
    return %c0_i32, %c0_i32_0 : i32, i32
  }
  func.func @transform_7(%arg0: i32) -> (i32, i32, i32) {
    %c0_i32 = arith.constant 0 : i32
    %c0_i32_0 = arith.constant 0 : i32
    %c0_i32_1 = arith.constant 0 : i32
    return %c0_i32, %c0_i32_0, %arg0 : i32, i32, i32
  }
}

</mosaic_0001>

<llo_original>
// kernel: tile.18
$region0: #{tile.18}
  #allocation0 [shape = 's32[1]{0}', space=sflag, size = 0x4, scoped, tag = 'scoped memory for tile.18']
  %s0 = inlined_call_operand.vmem [shape: f32[32], index: 0, kind: input, shape index: {}]
  %s1 = inlined_call_operand.vmem [shape: f32[8,32], index: 1, kind: output, shape index: {}]
  // Predicated region
  $region2: #{tile.18} parent=0 // pred_check
    _
  $region3: #{tile.18} parent=0 // pred_check_branch
    %3 = sbr.rel (0) target = $region5
  $region4: #{tile.18} parent=0 // pred_region
    _
  $region5: #{tile.18} parent=0 // pred_fallthru
    _
  %v4 = vld [vmem:[%s0] ss:$0 sm:$0xff]
  %5 = vst [vmem:[%s1] sm:$0xff] %v4

// kernel: tile.0
$region0: #{tile.0}
  %s0 = inlined_call_operand.vmem [shape: f32[8,32], index: 0, kind: input, shape index: {}]
  %s1 = inlined_call_operand.vmem [shape: f32[256,1], index: 1, kind: output, shape index: {}]
  %v2 = vld [vmem:[%s0] sm:$0xff]
  %vm3 = vcmask 7168
  %4 = vst.msk [vmem:[%s1] sm:$0x1] %vm3, %v2
  %s5 = scalar_lea.vmem %s1, 31
  %6 = vst.msk [vmem:[%s5] sm:$0x2] %vm3, %v2
  %s7 = scalar_lea.vmem %s1, 62
  %8 = vst.msk [vmem:[%s7] sm:$0x4] %vm3, %v2
  %s9 = scalar_lea.vmem %s1, 93
  %10 = vst.msk [vmem:[%s9] sm:$0x8] %vm3, %v2
  %s11 = scalar_lea.vmem %s1, 124
  %12 = vst.msk [vmem:[%s11] sm:$0x10] %vm3, %v2
  %s13 = scalar_lea.vmem %s1, 155
  %14 = vst.msk [vmem:[%s13] sm:$0x20] %vm3, %v2
  %s15 = scalar_lea.vmem %s1, 186
  %16 = vst.msk [vmem:[%s15] sm:$0x40] %vm3, %v2
  %s17 = scalar_lea.vmem %s1, 217
  %18 = vst.msk [vmem:[%s17] sm:$0x80] %vm3, %v2
  %v19 = vld [vmem:[%s0] sm:$0xff]
  %20 = vrot.lane.b32.xlu0 %v19, 127
  %v21 = vpop.permute.xlu0 %20
  %vm22 = vcmask 7168
  %s23 = scalar_lea.vmem %s1, 1
  %24 = vst.msk [vmem:[%s23] sm:$0x1] %vm22, %v21
  %s25 = scalar_lea.vmem %s1, 32
  %26 = vst.msk [vmem:[%s25] sm:$0x2] %vm22, %v21
  %s27 = scalar_lea.vmem %s1, 63
  %28 = vst.msk [vmem:[%s27] sm:$0x4] %vm22, %v21
  %s29 = scalar_lea.vmem %s1, 94
  %30 = vst.msk [vmem:[%s29] sm:$0x8] %vm22, %v21
  %s31 = scalar_lea.vmem %s1, 125
  %32 = vst.msk [vmem:[%s31] sm:$0x10] %vm22, %v21
  %s33 = scalar_lea.vmem %s1, 156
  %34 = vst.msk [vmem:[%s33] sm:$0x20] %vm22, %v21
  %s35 = scalar_lea.vmem %s1, 187
  %36 = vst.msk [vmem:[%s35] sm:$0x40] %vm22, %v21
  %s37 = scalar_lea.vmem %s1, 218
  %38 = vst.msk [vmem:[%s37] sm:$0x80] %vm22, %v21
  %v39 = vld [vmem:[%s0] sm:$0xff]
  %40 = vrot.lane.b32.xlu0 %v39, 126
  %v41 = vpop.permute.xlu0 %40
  %vm42 = vcmask 7168
  %s43 = scalar_lea.vmem %s1, 2
  %44 = vst.msk [vmem:[%s43] sm:$0x1] %vm42, %v41
  %s45 = scalar_lea.vmem %s1, 33
  %46 = vst.msk [vmem:[%s45] sm:$0x2] %vm42, %v41
  %s47 = scalar_lea.vmem %s1, 64
  %48 = vst.msk [vmem:[%s47] sm:$0x4] %vm42, %v41
  %s49 = scalar_lea.vmem %s1, 95
  %50 = vst.msk [vmem:[%s49] sm:$0x8] %vm42, %v41
  %s51 = scalar_lea.vmem %s1, 126
  %52 = vst.msk [vmem:[%s51] sm:$0x10] %vm42, %v41
  %s53 = scalar_lea.vmem %s1, 157
  %54 = vst.msk [vmem:[%s53] sm:$0x20] %vm42, %v41
  %s55 = scalar_lea.vmem %s1, 188
  %56 = vst.msk [vmem:[%s55] sm:$0x40] %vm42, %v41
  %s57 = scalar_lea.vmem %s1, 219
  %58 = vst.msk [vmem:[%s57] sm:$0x80] %vm42, %v41
  %v59 = vld [vmem:[%s0] sm:$0xff]
  %60 = vrot.lane.b32.xlu0 %v59, 125
  %v61 = vpop.permute.xlu0 %60
  %vm62 = vcmask 7168
  %s63 = scalar_lea.vmem %s1, 3
  %64 = vst.msk [vmem:[%s63] sm:$0x1] %vm62, %v61
  %s65 = scalar_lea.vmem %s1, 34
  %66 = vst.msk [vmem:[%s65] sm:$0x2] %vm62, %v61
  %s67 = scalar_lea.vmem %s1, 65
  %68 = vst.msk [vmem:[%s67] sm:$0x4] %vm62, %v61
  %s69 = scalar_lea.vmem %s1, 96
  %70 = vst.msk [vmem:[%s69] sm:$0x8] %vm62, %v61
  %s71 = scalar_lea.vmem %s1, 127
  %72 = vst.msk [vmem:[%s71] sm:$0x10] %vm62, %v61
  %s73 = scalar_lea.vmem %s1, 158
  %74 = vst.msk [vmem:[%s73] sm:$0x20] %vm62, %v61
  %s75 = scalar_lea.vmem %s1, 189
  %76 = vst.msk [vmem:[%s75] sm:$0x40] %vm62, %v61
  %s77 = scalar_lea.vmem %s1, 220
  %78 = vst.msk [vmem:[%s77] sm:$0x80] %vm62, %v61
  %v79 = vld [vmem:[%s0] sm:$0xff]
  %80 = vrot.lane.b32.xlu0 %v79, 124
  %v81 = vpop.permute.xlu0 %80
  %vm82 = vcmask 7168
  %s83 = scalar_lea.vmem %s1, 4
  %84 = vst.msk [vmem:[%s83] sm:$0x1] %vm82, %v81
  %s85 = scalar_lea.vmem %s1, 35
  %86 = vst.msk [vmem:[%s85] sm:$0x2] %vm82, %v81
  %s87 = scalar_lea.vmem %s1, 66
  %88 = vst.msk [vmem:[%s87] sm:$0x4] %vm82, %v81
  %s89 = scalar_lea.vmem %s1, 97
  %90 = vst.msk [vmem:[%s89] sm:$0x8] %vm82, %v81
  %s91 = scalar_lea.vmem %s1, 128
  %92 = vst.msk [vmem:[%s91] sm:$0x10] %vm82, %v81
  %s93 = scalar_lea.vmem %s1, 159
  %94 = vst.msk [vmem:[%s93] sm:$0x20] %vm82, %v81
  %s95 = scalar_lea.vmem %s1, 190
  %96 = vst.msk [vmem:[%s95] sm:$0x40] %vm82, %v81
  %s97 = scalar_lea.vmem %s1, 221
  %98 = vst.msk [vmem:[%s97] sm:$0x80] %vm82, %v81
  %v99 = vld [vmem:[%s0] sm:$0xff]
  %100 = vrot.lane.b32.xlu0 %v99, 123
  %v101 = vpop.permute.xlu0 %100
  %vm102 = vcmask 7168
  %s103 = scalar_lea.vmem %s1, 5
  %104 = vst.msk [vmem:[%s103] sm:$0x1] %vm102, %v101
  %s105 = scalar_lea.vmem %s1, 36
  %106 = vst.msk [vmem:[%s105] sm:$0x2] %vm102, %v101
  %s107 = scalar_lea.vmem %s1, 67
  %108 = vst.msk [vmem:[%s107] sm:$0x4] %vm102, %v101
  %s109 = scalar_lea.vmem %s1, 98
  %110 = vst.msk [vmem:[%s109] sm:$0x8] %vm102, %v101
  %s111 = scalar_lea.vmem %s1, 129
  %112 = vst.msk [vmem:[%s111] sm:$0x10] %vm102, %v101
  %s113 = scalar_lea.vmem %s1, 160
  %114 = vst.msk [vmem:[%s113] sm:$0x20] %vm102, %v101
  %s115 = scalar_lea.vmem %s1, 191
  %116 = vst.msk [vmem:[%s115] sm:$0x40] %vm102, %v101
  %s117 = scalar_lea.vmem %s1, 222
  %118 = vst.msk [vmem:[%s117] sm:$0x80] %vm102, %v101
  %v119 = vld [vmem:[%s0] sm:$0xff]
  %120 = vrot.lane.b32.xlu0 %v119, 122
  %v121 = vpop.permute.xlu0 %120
  %vm122 = vcmask 7168
  %s123 = scalar_lea.vmem %s1, 6
  %124 = vst.msk [vmem:[%s123] sm:$0x1] %vm122, %v121
  %s125 = scalar_lea.vmem %s1, 37
  %126 = vst.msk [vmem:[%s125] sm:$0x2] %vm122, %v121
  %s127 = scalar_lea.vmem %s1, 68
  %128 = vst.msk [vmem:[%s127] sm:$0x4] %vm122, %v121
  %s129 = scalar_lea.vmem %s1, 99
  %130 = vst.msk [vmem:[%s129] sm:$0x8] %vm122, %v121
  %s131 = scalar_lea.vmem %s1, 130
  %132 = vst.msk [vmem:[%s131] sm:$0x10] %vm122, %v121
  %s133 = scalar_lea.vmem %s1, 161
  %134 = vst.msk [vmem:[%s133] sm:$0x20] %vm122, %v121
  %s135 = scalar_lea.vmem %s1, 192
  %136 = vst.msk [vmem:[%s135] sm:$0x40] %vm122, %v121
  %s137 = scalar_lea.vmem %s1, 223
  %138 = vst.msk [vmem:[%s137] sm:$0x80] %vm122, %v121
  %v139 = vld [vmem:[%s0] sm:$0xff]
  %140 = vrot.lane.b32.xlu0 %v139, 121
  %v141 = vpop.permute.xlu0 %140
  %vm142 = vcmask 7168
  %s143 = scalar_lea.vmem %s1, 7
  %144 = vst.msk [vmem:[%s143] sm:$0x1] %vm142, %v141
  %s145 = scalar_lea.vmem %s1, 38
  %146 = vst.msk [vmem:[%s145] sm:$0x2] %vm142, %v141
  %s147 = scalar_lea.vmem %s1, 69
  %148 = vst.msk [vmem:[%s147] sm:$0x4] %vm142, %v141
  %s149 = scalar_lea.vmem %s1, 100
  %150 = vst.msk [vmem:[%s149] sm:$0x8] %vm142, %v141
  %s151 = scalar_lea.vmem %s1, 131
  %152 = vst.msk [vmem:[%s151] sm:$0x10] %vm142, %v141
  %s153 = scalar_lea.vmem %s1, 162
  %154 = vst.msk [vmem:[%s153] sm:$0x20] %vm142, %v141
  %s155 = scalar_lea.vmem %s1, 193
  %156 = vst.msk [vmem:[%s155] sm:$0x40] %vm142, %v141
  %s157 = scalar_lea.vmem %s1, 224
  %158 = vst.msk [vmem:[%s157] sm:$0x80] %vm142, %v141
  %v159 = vld [vmem:[%s0] sm:$0xff]
  %160 = vrot.lane.b32.xlu0 %v159, 120
  %v161 = vpop.permute.xlu0 %160
  %vm162 = vcmask 7168
  %s163 = scalar_lea.vmem %s1, 8
  %164 = vst.msk [vmem:[%s163] sm:$0x1] %vm162, %v161
  %s165 = scalar_lea.vmem %s1, 39
  %166 = vst.msk [vmem:[%s165] sm:$0x2] %vm162, %v161
  %s167 = scalar_lea.vmem %s1, 70
  %168 = vst.msk [vmem:[%s167] sm:$0x4] %vm162, %v161
  %s169 = scalar_lea.vmem %s1, 101
  %170 = vst.msk [vmem:[%s169] sm:$0x8] %vm162, %v161
  %s171 = scalar_lea.vmem %s1, 132
  %172 = vst.msk [vmem:[%s171] sm:$0x10] %vm162, %v161
  %s173 = scalar_lea.vmem %s1, 163
  %174 = vst.msk [vmem:[%s173] sm:$0x20] %vm162, %v161
  %s175 = scalar_lea.vmem %s1, 194
  %176 = vst.msk [vmem:[%s175] sm:$0x40] %vm162, %v161
  %s177 = scalar_lea.vmem %s1, 225
  %178 = vst.msk [vmem:[%s177] sm:$0x80] %vm162, %v161
  %v179 = vld [vmem:[%s0] sm:$0xff]
  %180 = vrot.lane.b32.xlu0 %v179, 119
  %v181 = vpop.permute.xlu0 %180
  %vm182 = vcmask 7168
  %s183 = scalar_lea.vmem %s1, 9
  %184 = vst.msk [vmem:[%s183] sm:$0x1] %vm182, %v181
  %s185 = scalar_lea.vmem %s1, 40
  %186 = vst.msk [vmem:[%s185] sm:$0x2] %vm182, %v181
  %s187 = scalar_lea.vmem %s1, 71
  %188 = vst.msk [vmem:[%s187] sm:$0x4] %vm182, %v181
  %s189 = scalar_lea.vmem %s1, 102
  %190 = vst.msk [vmem:[%s189] sm:$0x8] %vm182, %v181
  %s191 = scalar_lea.vmem %s1, 133
  %192 = vst.msk [vmem:[%s191] sm:$0x10] %vm182, %v181
  %s193 = scalar_lea.vmem %s1, 164
  %194 = vst.msk [vmem:[%s193] sm:$0x20] %vm182, %v181
  %s195 = scalar_lea.vmem %s1, 195
  %196 = vst.msk [vmem:[%s195] sm:$0x40] %vm182, %v181
  %s197 = scalar_lea.vmem %s1, 226
  %198 = vst.msk [vmem:[%s197] sm:$0x80] %vm182, %v181
  %v199 = vld [vmem:[%s0] sm:$0xff]
  %200 = vrot.lane.b32.xlu0 %v199, 118
  %v201 = vpop.permute.xlu0 %200
  %vm202 = vcmask 7168
  %s203 = scalar_lea.vmem %s1, 10
  %204 = vst.msk [vmem:[%s203] sm:$0x1] %vm202, %v201
  %s205 = scalar_lea.vmem %s1, 41
  %206 = vst.msk [vmem:[%s205] sm:$0x2] %vm202, %v201
  %s207 = scalar_lea.vmem %s1, 72
  %208 = vst.msk [vmem:[%s207] sm:$0x4] %vm202, %v201
  %s209 = scalar_lea.vmem %s1, 103
  %210 = vst.msk [vmem:[%s209] sm:$0x8] %vm202, %v201
  %s211 = scalar_lea.vmem %s1, 134
  %212 = vst.msk [vmem:[%s211] sm:$0x10] %vm202, %v201
  %s213 = scalar_lea.vmem %s1, 165
  %214 = vst.msk [vmem:[%s213] sm:$0x20] %vm202, %v201
  %s215 = scalar_lea.vmem %s1, 196
  %216 = vst.msk [vmem:[%s215] sm:$0x40] %vm202, %v201
  %s217 = scalar_lea.vmem %s1, 227
  %218 = vst.msk [vmem:[%s217] sm:$0x80] %vm202, %v201
  %v219 = vld [vmem:[%s0] sm:$0xff]
  %220 = vrot.lane.b32.xlu0 %v219, 117
  %v221 = vpop.permute.xlu0 %220
  %vm222 = vcmask 7168
  %s223 = scalar_lea.vmem %s1, 11
  %224 = vst.msk [vmem:[%s223] sm:$0x1] %vm222, %v221
  %s225 = scalar_lea.vmem %s1, 42
  %226 = vst.msk [vmem:[%s225] sm:$0x2] %vm222, %v221
  %s227 = scalar_lea.vmem %s1, 73
  %228 = vst.msk [vmem:[%s227] sm:$0x4] %vm222, %v221
  %s229 = scalar_lea.vmem %s1, 104
  %230 = vst.msk [vmem:[%s229] sm:$0x8] %vm222, %v221
  %s231 = scalar_lea.vmem %s1, 135
  %232 = vst.msk [vmem:[%s231] sm:$0x10] %vm222, %v221
  %s233 = scalar_lea.vmem %s1, 166
  %234 = vst.msk [vmem:[%s233] sm:$0x20] %vm222, %v221
  %s235 = scalar_lea.vmem %s1, 197
  %236 = vst.msk [vmem:[%s235] sm:$0x40] %vm222, %v221
  %s237 = scalar_lea.vmem %s1, 228
  %238 = vst.msk [vmem:[%s237] sm:$0x80] %vm222, %v221
  %v239 = vld [vmem:[%s0] sm:$0xff]
  %240 = vrot.lane.b32.xlu0 %v239, 116
  %v241 = vpop.permute.xlu0 %240
  %vm242 = vcmask 7168
  %s243 = scalar_lea.vmem %s1, 12
  %244 = vst.msk [vmem:[%s243] sm:$0x1] %vm242, %v241
  %s245 = scalar_lea.vmem %s1, 43
  %246 = vst.msk [vmem:[%s245] sm:$0x2] %vm242, %v241
  %s247 = scalar_lea.vmem %s1, 74
  %248 = vst.msk [vmem:[%s247] sm:$0x4] %vm242, %v241
  %s249 = scalar_lea.vmem %s1, 105
  %250 = vst.msk [vmem:[%s249] sm:$0x8] %vm242, %v241
  %s251 = scalar_lea.vmem %s1, 136
  %252 = vst.msk [vmem:[%s251] sm:$0x10] %vm242, %v241
  %s253 = scalar_lea.vmem %s1, 167
  %254 = vst.msk [vmem:[%s253] sm:$0x20] %vm242, %v241
  %s255 = scalar_lea.vmem %s1, 198
  %256 = vst.msk [vmem:[%s255] sm:$0x40] %vm242, %v241
  %s257 = scalar_lea.vmem %s1, 229
  %258 = vst.msk [vmem:[%s257] sm:$0x80] %vm242, %v241
  %v259 = vld [vmem:[%s0] sm:$0xff]
  %260 = vrot.lane.b32.xlu0 %v259, 115
  %v261 = vpop.permute.xlu0 %260
  %vm262 = vcmask 7168
  %s263 = scalar_lea.vmem %s1, 13
  %264 = vst.msk [vmem:[%s263] sm:$0x1] %vm262, %v261
  %s265 = scalar_lea.vmem %s1, 44
  %266 = vst.msk [vmem:[%s265] sm:$0x2] %vm262, %v261
  %s267 = scalar_lea.vmem %s1, 75
  %268 = vst.msk [vmem:[%s267] sm:$0x4] %vm262, %v261
  %s269 = scalar_lea.vmem %s1, 106
  %270 = vst.msk [vmem:[%s269] sm:$0x8] %vm262, %v261
  %s271 = scalar_lea.vmem %s1, 137
  %272 = vst.msk [vmem:[%s271] sm:$0x10] %vm262, %v261
  %s273 = scalar_lea.vmem %s1, 168
  %274 = vst.msk [vmem:[%s273] sm:$0x20] %vm262, %v261
  %s275 = scalar_lea.vmem %s1, 199
  %276 = vst.msk [vmem:[%s275] sm:$0x40] %vm262, %v261
  %s277 = scalar_lea.vmem %s1, 230
  %278 = vst.msk [vmem:[%s277] sm:$0x80] %vm262, %v261
  %v279 = vld [vmem:[%s0] sm:$0xff]
  %280 = vrot.lane.b32.xlu0 %v279, 114
  %v281 = vpop.permute.xlu0 %280
  %vm282 = vcmask 7168
  %s283 = scalar_lea.vmem %s1, 14
  %284 = vst.msk [vmem:[%s283] sm:$0x1] %vm282, %v281
  %s285 = scalar_lea.vmem %s1, 45
  %286 = vst.msk [vmem:[%s285] sm:$0x2] %vm282, %v281
  %s287 = scalar_lea.vmem %s1, 76
  %288 = vst.msk [vmem:[%s287] sm:$0x4] %vm282, %v281
  %s289 = scalar_lea.vmem %s1, 107
  %290 = vst.msk [vmem:[%s289] sm:$0x8] %vm282, %v281
  %s291 = scalar_lea.vmem %s1, 138
  %292 = vst.msk [vmem:[%s291] sm:$0x10] %vm282, %v281
  %s293 = scalar_lea.vmem %s1, 169
  %294 = vst.msk [vmem:[%s293] sm:$0x20] %vm282, %v281
  %s295 = scalar_lea.vmem %s1, 200
  %296 = vst.msk [vmem:[%s295] sm:$0x40] %vm282, %v281
  %s297 = scalar_lea.vmem %s1, 231
  %298 = vst.msk [vmem:[%s297] sm:$0x80] %vm282, %v281
  %v299 = vld [vmem:[%s0] sm:$0xff]
  %300 = vrot.lane.b32.xlu0 %v299, 113
  %v301 = vpop.permute.xlu0 %300
  %vm302 = vcmask 7168
  %s303 = scalar_lea.vmem %s1, 15
  %304 = vst.msk [vmem:[%s303] sm:$0x1] %vm302, %v301
  %s305 = scalar_lea.vmem %s1, 46
  %306 = vst.msk [vmem:[%s305] sm:$0x2] %vm302, %v301
  %s307 = scalar_lea.vmem %s1, 77
  %308 = vst.msk [vmem:[%s307] sm:$0x4] %vm302, %v301
  %s309 = scalar_lea.vmem %s1, 108
  %310 = vst.msk [vmem:[%s309] sm:$0x8] %vm302, %v301
  %s311 = scalar_lea.vmem %s1, 139
  %312 = vst.msk [vmem:[%s311] sm:$0x10] %vm302, %v301
  %s313 = scalar_lea.vmem %s1, 170
  %314 = vst.msk [vmem:[%s313] sm:$0x20] %vm302, %v301
  %s315 = scalar_lea.vmem %s1, 201
  %316 = vst.msk [vmem:[%s315] sm:$0x40] %vm302, %v301
  %s317 = scalar_lea.vmem %s1, 232
  %318 = vst.msk [vmem:[%s317] sm:$0x80] %vm302, %v301
  %v319 = vld [vmem:[%s0] sm:$0xff]
  %320 = vrot.lane.b32.xlu0 %v319, 112
  %v321 = vpop.permute.xlu0 %320
  %vm322 = vcmask 7168
  %s323 = scalar_lea.vmem %s1, 16
  %324 = vst.msk [vmem:[%s323] sm:$0x1] %vm322, %v321
  %s325 = scalar_lea.vmem %s1, 47
  %326 = vst.msk [vmem:[%s325] sm:$0x2] %vm322, %v321
  %s327 = scalar_lea.vmem %s1, 78
  %328 = vst.msk [vmem:[%s327] sm:$0x4] %vm322, %v321
  %s329 = scalar_lea.vmem %s1, 109
  %330 = vst.msk [vmem:[%s329] sm:$0x8] %vm322, %v321
  %s331 = scalar_lea.vmem %s1, 140
  %332 = vst.msk [vmem:[%s331] sm:$0x10] %vm322, %v321
  %s333 = scalar_lea.vmem %s1, 171
  %334 = vst.msk [vmem:[%s333] sm:$0x20] %vm322, %v321
  %s335 = scalar_lea.vmem %s1, 202
  %336 = vst.msk [vmem:[%s335] sm:$0x40] %vm322, %v321
  %s337 = scalar_lea.vmem %s1, 233
  %338 = vst.msk [vmem:[%s337] sm:$0x80] %vm322, %v321
  %v339 = vld [vmem:[%s0] sm:$0xff]
  %340 = vrot.lane.b32.xlu0 %v339, 111
  %v341 = vpop.permute.xlu0 %340
  %vm342 = vcmask 7168
  %s343 = scalar_lea.vmem %s1, 17
  %344 = vst.msk [vmem:[%s343] sm:$0x1] %vm342, %v341
  %s345 = scalar_lea.vmem %s1, 48
  %346 = vst.msk [vmem:[%s345] sm:$0x2] %vm342, %v341
  %s347 = scalar_lea.vmem %s1, 79
  %348 = vst.msk [vmem:[%s347] sm:$0x4] %vm342, %v341
  %s349 = scalar_lea.vmem %s1, 110
  %350 = vst.msk [vmem:[%s349] sm:$0x8] %vm342, %v341
  %s351 = scalar_lea.vmem %s1, 141
  %352 = vst.msk [vmem:[%s351] sm:$0x10] %vm342, %v341
  %s353 = scalar_lea.vmem %s1, 172
  %354 = vst.msk [vmem:[%s353] sm:$0x20] %vm342, %v341
  %s355 = scalar_lea.vmem %s1, 203
  %356 = vst.msk [vmem:[%s355] sm:$0x40] %vm342, %v341
  %s357 = scalar_lea.vmem %s1, 234
  %358 = vst.msk [vmem:[%s357] sm:$0x80] %vm342, %v341
  %v359 = vld [vmem:[%s0] sm:$0xff]
  %360 = vrot.lane.b32.xlu0 %v359, 110
  %v361 = vpop.permute.xlu0 %360
  %vm362 = vcmask 7168
  %s363 = scalar_lea.vmem %s1, 18
  %364 = vst.msk [vmem:[%s363] sm:$0x1] %vm362, %v361
  %s365 = scalar_lea.vmem %s1, 49
  %366 = vst.msk [vmem:[%s365] sm:$0x2] %vm362, %v361
  %s367 = scalar_lea.vmem %s1, 80
  %368 = vst.msk [vmem:[%s367] sm:$0x4] %vm362, %v361
  %s369 = scalar_lea.vmem %s1, 111
  %370 = vst.msk [vmem:[%s369] sm:$0x8] %vm362, %v361
  %s371 = scalar_lea.vmem %s1, 142
  %372 = vst.msk [vmem:[%s371] sm:$0x10] %vm362, %v361
  %s373 = scalar_lea.vmem %s1, 173
  %374 = vst.msk [vmem:[%s373] sm:$0x20] %vm362, %v361
  %s375 = scalar_lea.vmem %s1, 204
  %376 = vst.msk [vmem:[%s375] sm:$0x40] %vm362, %v361
  %s377 = scalar_lea.vmem %s1, 235
  %378 = vst.msk [vmem:[%s377] sm:$0x80] %vm362, %v361
  %v379 = vld [vmem:[%s0] sm:$0xff]
  %380 = vrot.lane.b32.xlu0 %v379, 109
  %v381 = vpop.permute.xlu0 %380
  %vm382 = vcmask 7168
  %s383 = scalar_lea.vmem %s1, 19
  %384 = vst.msk [vmem:[%s383] sm:$0x1] %vm382, %v381
  %s385 = scalar_lea.vmem %s1, 50
  %386 = vst.msk [vmem:[%s385] sm:$0x2] %vm382, %v381
  %s387 = scalar_lea.vmem %s1, 81
  %388 = vst.msk [vmem:[%s387] sm:$0x4] %vm382, %v381
  %s389 = scalar_lea.vmem %s1, 112
  %390 = vst.msk [vmem:[%s389] sm:$0x8] %vm382, %v381
  %s391 = scalar_lea.vmem %s1, 143
  %392 = vst.msk [vmem:[%s391] sm:$0x10] %vm382, %v381
  %s393 = scalar_lea.vmem %s1, 174
  %394 = vst.msk [vmem:[%s393] sm:$0x20] %vm382, %v381
  %s395 = scalar_lea.vmem %s1, 205
  %396 = vst.msk [vmem:[%s395] sm:$0x40] %vm382, %v381
  %s397 = scalar_lea.vmem %s1, 236
  %398 = vst.msk [vmem:[%s397] sm:$0x80] %vm382, %v381
  %v399 = vld [vmem:[%s0] sm:$0xff]
  %400 = vrot.lane.b32.xlu0 %v399, 108
  %v401 = vpop.permute.xlu0 %400
  %vm402 = vcmask 7168
  %s403 = scalar_lea.vmem %s1, 20
  %404 = vst.msk [vmem:[%s403] sm:$0x1] %vm402, %v401
  %s405 = scalar_lea.vmem %s1, 51
  %406 = vst.msk [vmem:[%s405] sm:$0x2] %vm402, %v401
  %s407 = scalar_lea.vmem %s1, 82
  %408 = vst.msk [vmem:[%s407] sm:$0x4] %vm402, %v401
  %s409 = scalar_lea.vmem %s1, 113
  %410 = vst.msk [vmem:[%s409] sm:$0x8] %vm402, %v401
  %s411 = scalar_lea.vmem %s1, 144
  %412 = vst.msk [vmem:[%s411] sm:$0x10] %vm402, %v401
  %s413 = scalar_lea.vmem %s1, 175
  %414 = vst.msk [vmem:[%s413] sm:$0x20] %vm402, %v401
  %s415 = scalar_lea.vmem %s1, 206
  %416 = vst.msk [vmem:[%s415] sm:$0x40] %vm402, %v401
  %s417 = scalar_lea.vmem %s1, 237
  %418 = vst.msk [vmem:[%s417] sm:$0x80] %vm402, %v401
  %v419 = vld [vmem:[%s0] sm:$0xff]
  %420 = vrot.lane.b32.xlu0 %v419, 107
  %v421 = vpop.permute.xlu0 %420
  %vm422 = vcmask 7168
  %s423 = scalar_lea.vmem %s1, 21
  %424 = vst.msk [vmem:[%s423] sm:$0x1] %vm422, %v421
  %s425 = scalar_lea.vmem %s1, 52
  %426 = vst.msk [vmem:[%s425] sm:$0x2] %vm422, %v421
  %s427 = scalar_lea.vmem %s1, 83
  %428 = vst.msk [vmem:[%s427] sm:$0x4] %vm422, %v421
  %s429 = scalar_lea.vmem %s1, 114
  %430 = vst.msk [vmem:[%s429] sm:$0x8] %vm422, %v421
  %s431 = scalar_lea.vmem %s1, 145
  %432 = vst.msk [vmem:[%s431] sm:$0x10] %vm422, %v421
  %s433 = scalar_lea.vmem %s1, 176
  %434 = vst.msk [vmem:[%s433] sm:$0x20] %vm422, %v421
  %s435 = scalar_lea.vmem %s1, 207
  %436 = vst.msk [vmem:[%s435] sm:$0x40] %vm422, %v421
  %s437 = scalar_lea.vmem %s1, 238
  %438 = vst.msk [vmem:[%s437] sm:$0x80] %vm422, %v421
  %v439 = vld [vmem:[%s0] sm:$0xff]
  %440 = vrot.lane.b32.xlu0 %v439, 106
  %v441 = vpop.permute.xlu0 %440
  %vm442 = vcmask 7168
  %s443 = scalar_lea.vmem %s1, 22
  %444 = vst.msk [vmem:[%s443] sm:$0x1] %vm442, %v441
  %s445 = scalar_lea.vmem %s1, 53
  %446 = vst.msk [vmem:[%s445] sm:$0x2] %vm442, %v441
  %s447 = scalar_lea.vmem %s1, 84
  %448 = vst.msk [vmem:[%s447] sm:$0x4] %vm442, %v441
  %s449 = scalar_lea.vmem %s1, 115
  %450 = vst.msk [vmem:[%s449] sm:$0x8] %vm442, %v441
  %s451 = scalar_lea.vmem %s1, 146
  %452 = vst.msk [vmem:[%s451] sm:$0x10] %vm442, %v441
  %s453 = scalar_lea.vmem %s1, 177
  %454 = vst.msk [vmem:[%s453] sm:$0x20] %vm442, %v441
  %s455 = scalar_lea.vmem %s1, 208
  %456 = vst.msk [vmem:[%s455] sm:$0x40] %vm442, %v441
  %s457 = scalar_lea.vmem %s1, 239
  %458 = vst.msk [vmem:[%s457] sm:$0x80] %vm442, %v441
  %v459 = vld [vmem:[%s0] sm:$0xff]
  %460 = vrot.lane.b32.xlu0 %v459, 105
  %v461 = vpop.permute.xlu0 %460
  %vm462 = vcmask 7168
  %s463 = scalar_lea.vmem %s1, 23
  %464 = vst.msk [vmem:[%s463] sm:$0x1] %vm462, %v461
  %s465 = scalar_lea.vmem %s1, 54
  %466 = vst.msk [vmem:[%s465] sm:$0x2] %vm462, %v461
  %s467 = scalar_lea.vmem %s1, 85
  %468 = vst.msk [vmem:[%s467] sm:$0x4] %vm462, %v461
  %s469 = scalar_lea.vmem %s1, 116
  %470 = vst.msk [vmem:[%s469] sm:$0x8] %vm462, %v461
  %s471 = scalar_lea.vmem %s1, 147
  %472 = vst.msk [vmem:[%s471] sm:$0x10] %vm462, %v461
  %s473 = scalar_lea.vmem %s1, 178
  %474 = vst.msk [vmem:[%s473] sm:$0x20] %vm462, %v461
  %s475 = scalar_lea.vmem %s1, 209
  %476 = vst.msk [vmem:[%s475] sm:$0x40] %vm462, %v461
  %s477 = scalar_lea.vmem %s1, 240
  %478 = vst.msk [vmem:[%s477] sm:$0x80] %vm462, %v461
  %v479 = vld [vmem:[%s0] sm:$0xff]
  %480 = vrot.lane.b32.xlu0 %v479, 104
  %v481 = vpop.permute.xlu0 %480
  %vm482 = vcmask 7168
  %s483 = scalar_lea.vmem %s1, 24
  %484 = vst.msk [vmem:[%s483] sm:$0x1] %vm482, %v481
  %s485 = scalar_lea.vmem %s1, 55
  %486 = vst.msk [vmem:[%s485] sm:$0x2] %vm482, %v481
  %s487 = scalar_lea.vmem %s1, 86
  %488 = vst.msk [vmem:[%s487] sm:$0x4] %vm482, %v481
  %s489 = scalar_lea.vmem %s1, 117
  %490 = vst.msk [vmem:[%s489] sm:$0x8] %vm482, %v481
  %s491 = scalar_lea.vmem %s1, 148
  %492 = vst.msk [vmem:[%s491] sm:$0x10] %vm482, %v481
  %s493 = scalar_lea.vmem %s1, 179
  %494 = vst.msk [vmem:[%s493] sm:$0x20] %vm482, %v481
  %s495 = scalar_lea.vmem %s1, 210
  %496 = vst.msk [vmem:[%s495] sm:$0x40] %vm482, %v481
  %s497 = scalar_lea.vmem %s1, 241
  %498 = vst.msk [vmem:[%s497] sm:$0x80] %vm482, %v481
  %v499 = vld [vmem:[%s0] sm:$0xff]
  %500 = vrot.lane.b32.xlu0 %v499, 103
  %v501 = vpop.permute.xlu0 %500
  %vm502 = vcmask 7168
  %s503 = scalar_lea.vmem %s1, 25
  %504 = vst.msk [vmem:[%s503] sm:$0x1] %vm502, %v501
  %s505 = scalar_lea.vmem %s1, 56
  %506 = vst.msk [vmem:[%s505] sm:$0x2] %vm502, %v501
  %s507 = scalar_lea.vmem %s1, 87
  %508 = vst.msk [vmem:[%s507] sm:$0x4] %vm502, %v501
  %s509 = scalar_lea.vmem %s1, 118
  %510 = vst.msk [vmem:[%s509] sm:$0x8] %vm502, %v501
  %s511 = scalar_lea.vmem %s1, 149
  %512 = vst.msk [vmem:[%s511] sm:$0x10] %vm502, %v501
  %s513 = scalar_lea.vmem %s1, 180
  %514 = vst.msk [vmem:[%s513] sm:$0x20] %vm502, %v501
  %s515 = scalar_lea.vmem %s1, 211
  %516 = vst.msk [vmem:[%s515] sm:$0x40] %vm502, %v501
  %s517 = scalar_lea.vmem %s1, 242
  %518 = vst.msk [vmem:[%s517] sm:$0x80] %vm502, %v501
  %v519 = vld [vmem:[%s0] sm:$0xff]
  %520 = vrot.lane.b32.xlu0 %v519, 102
  %v521 = vpop.permute.xlu0 %520
  %vm522 = vcmask 7168
  %s523 = scalar_lea.vmem %s1, 26
  %524 = vst.msk [vmem:[%s523] sm:$0x1] %vm522, %v521
  %s525 = scalar_lea.vmem %s1, 57
  %526 = vst.msk [vmem:[%s525] sm:$0x2] %vm522, %v521
  %s527 = scalar_lea.vmem %s1, 88
  %528 = vst.msk [vmem:[%s527] sm:$0x4] %vm522, %v521
  %s529 = scalar_lea.vmem %s1, 119
  %530 = vst.msk [vmem:[%s529] sm:$0x8] %vm522, %v521
  %s531 = scalar_lea.vmem %s1, 150
  %532 = vst.msk [vmem:[%s531] sm:$0x10] %vm522, %v521
  %s533 = scalar_lea.vmem %s1, 181
  %534 = vst.msk [vmem:[%s533] sm:$0x20] %vm522, %v521
  %s535 = scalar_lea.vmem %s1, 212
  %536 = vst.msk [vmem:[%s535] sm:$0x40] %vm522, %v521
  %s537 = scalar_lea.vmem %s1, 243
  %538 = vst.msk [vmem:[%s537] sm:$0x80] %vm522, %v521
  %v539 = vld [vmem:[%s0] sm:$0xff]
  %540 = vrot.lane.b32.xlu0 %v539, 101
  %v541 = vpop.permute.xlu0 %540
  %vm542 = vcmask 7168
  %s543 = scalar_lea.vmem %s1, 27
  %544 = vst.msk [vmem:[%s543] sm:$0x1] %vm542, %v541
  %s545 = scalar_lea.vmem %s1, 58
  %546 = vst.msk [vmem:[%s545] sm:$0x2] %vm542, %v541
  %s547 = scalar_lea.vmem %s1, 89
  %548 = vst.msk [vmem:[%s547] sm:$0x4] %vm542, %v541
  %s549 = scalar_lea.vmem %s1, 120
  %550 = vst.msk [vmem:[%s549] sm:$0x8] %vm542, %v541
  %s551 = scalar_lea.vmem %s1, 151
  %552 = vst.msk [vmem:[%s551] sm:$0x10] %vm542, %v541
  %s553 = scalar_lea.vmem %s1, 182
  %554 = vst.msk [vmem:[%s553] sm:$0x20] %vm542, %v541
  %s555 = scalar_lea.vmem %s1, 213
  %556 = vst.msk [vmem:[%s555] sm:$0x40] %vm542, %v541
  %s557 = scalar_lea.vmem %s1, 244
  %558 = vst.msk [vmem:[%s557] sm:$0x80] %vm542, %v541
  %v559 = vld [vmem:[%s0] sm:$0xff]
  %560 = vrot.lane.b32.xlu0 %v559, 100
  %v561 = vpop.permute.xlu0 %560
  %vm562 = vcmask 7168
  %s563 = scalar_lea.vmem %s1, 28
  %564 = vst.msk [vmem:[%s563] sm:$0x1] %vm562, %v561
  %s565 = scalar_lea.vmem %s1, 59
  %566 = vst.msk [vmem:[%s565] sm:$0x2] %vm562, %v561
  %s567 = scalar_lea.vmem %s1, 90
  %568 = vst.msk [vmem:[%s567] sm:$0x4] %vm562, %v561
  %s569 = scalar_lea.vmem %s1, 121
  %570 = vst.msk [vmem:[%s569] sm:$0x8] %vm562, %v561
  %s571 = scalar_lea.vmem %s1, 152
  %572 = vst.msk [vmem:[%s571] sm:$0x10] %vm562, %v561
  %s573 = scalar_lea.vmem %s1, 183
  %574 = vst.msk [vmem:[%s573] sm:$0x20] %vm562, %v561
  %s575 = scalar_lea.vmem %s1, 214
  %576 = vst.msk [vmem:[%s575] sm:$0x40] %vm562, %v561
  %s577 = scalar_lea.vmem %s1, 245
  %578 = vst.msk [vmem:[%s577] sm:$0x80] %vm562, %v561
  %v579 = vld [vmem:[%s0] sm:$0xff]
  %580 = vrot.lane.b32.xlu0 %v579, 99
  %v581 = vpop.permute.xlu0 %580
  %vm582 = vcmask 7168
  %s583 = scalar_lea.vmem %s1, 29
  %584 = vst.msk [vmem:[%s583] sm:$0x1] %vm582, %v581
  %s585 = scalar_lea.vmem %s1, 60
  %586 = vst.msk [vmem:[%s585] sm:$0x2] %vm582, %v581
  %s587 = scalar_lea.vmem %s1, 91
  %588 = vst.msk [vmem:[%s587] sm:$0x4] %vm582, %v581
  %s589 = scalar_lea.vmem %s1, 122
  %590 = vst.msk [vmem:[%s589] sm:$0x8] %vm582, %v581
  %s591 = scalar_lea.vmem %s1, 153
  %592 = vst.msk [vmem:[%s591] sm:$0x10] %vm582, %v581
  %s593 = scalar_lea.vmem %s1, 184
  %594 = vst.msk [vmem:[%s593] sm:$0x20] %vm582, %v581
  %s595 = scalar_lea.vmem %s1, 215
  %596 = vst.msk [vmem:[%s595] sm:$0x40] %vm582, %v581
  %s597 = scalar_lea.vmem %s1, 246
  %598 = vst.msk [vmem:[%s597] sm:$0x80] %vm582, %v581
  %v599 = vld [vmem:[%s0] sm:$0xff]
  %600 = vrot.lane.b32.xlu0 %v599, 98
  %v601 = vpop.permute.xlu0 %600
  %vm602 = vcmask 7168
  %s603 = scalar_lea.vmem %s1, 30
  %604 = vst.msk [vmem:[%s603] sm:$0x1] %vm602, %v601
  %s605 = scalar_lea.vmem %s1, 61
  %606 = vst.msk [vmem:[%s605] sm:$0x2] %vm602, %v601
  %s607 = scalar_lea.vmem %s1, 92
  %608 = vst.msk [vmem:[%s607] sm:$0x4] %vm602, %v601
  %s609 = scalar_lea.vmem %s1, 123
  %610 = vst.msk [vmem:[%s609] sm:$0x8] %vm602, %v601
  %s611 = scalar_lea.vmem %s1, 154
  %612 = vst.msk [vmem:[%s611] sm:$0x10] %vm602, %v601
  %s613 = scalar_lea.vmem %s1, 185
  %614 = vst.msk [vmem:[%s613] sm:$0x20] %vm602, %v601
  %s615 = scalar_lea.vmem %s1, 216
  %616 = vst.msk [vmem:[%s615] sm:$0x40] %vm602, %v601
  %s617 = scalar_lea.vmem %s1, 247
  %618 = vst.msk [vmem:[%s617] sm:$0x80] %vm602, %v601
  %v619 = vld [vmem:[%s0] sm:$0xff]
  %620 = vrot.lane.b32.xlu0 %v619, 97
  %v621 = vpop.permute.xlu0 %620
  %vm622 = vcmask 7168
  %s623 = scalar_lea.vmem %s1, 31
  %624 = vst.msk [vmem:[%s623] sm:$0x1] %vm622, %v621
  %s625 = scalar_lea.vmem %s1, 62
  %626 = vst.msk [vmem:[%s625] sm:$0x2] %vm622, %v621
  %s627 = scalar_lea.vmem %s1, 93
  %628 = vst.msk [vmem:[%s627] sm:$0x4] %vm622, %v621
  %s629 = scalar_lea.vmem %s1, 124
  %630 = vst.msk [vmem:[%s629] sm:$0x8] %vm622, %v621
  %s631 = scalar_lea.vmem %s1, 155
  %632 = vst.msk [vmem:[%s631] sm:$0x10] %vm622, %v621
  %s633 = scalar_lea.vmem %s1, 186
  %634 = vst.msk [vmem:[%s633] sm:$0x20] %vm622, %v621
  %s635 = scalar_lea.vmem %s1, 217
  %636 = vst.msk [vmem:[%s635] sm:$0x40] %vm622, %v621
  %s637 = scalar_lea.vmem %s1, 248
  %638 = vst.msk [vmem:[%s637] sm:$0x80] %vm622, %v621

// kernel: tile.28
$region0: #{tile.28}
  #allocation0 [shape = 's32[1]{0}', space=sflag, size = 0x4, scoped, tag = 'scoped memory for tile.28']
  %s0 = inlined_call_operand.vmem [shape: f32[8], index: 0, kind: input, shape index: {}]
  %s1 = inlined_call_operand.vmem [shape: f32[8,8], index: 1, kind: output, shape index: {}]
  // Predicated region
  $region2: #{tile.28} parent=0 // pred_check
    _
  $region3: #{tile.28} parent=0 // pred_check_branch
    %3 = sbr.rel (0) target = $region5
  $region4: #{tile.28} parent=0 // pred_region
    _
  $region5: #{tile.28} parent=0 // pred_fallthru
    _
  %v4 = vld [vmem:[%s0] ss:$0 sm:$0xff]
  %5 = vst [vmem:[%s1] sm:$0xff] %v4

// kernel: tile.2
$region0: #{tile.2}
  %s0 = inlined_call_operand.vmem [shape: f32[8,8], index: 0, kind: input, shape index: {}]
  %s1 = inlined_call_operand.vmem [shape: f32[64,1], index: 1, kind: output, shape index: {}]
  %v2 = vld [vmem:[%s0] sm:$0xff]
  %vm3 = vcmask 7168
  %4 = vst.msk [vmem:[%s1] ss:$8 sm:$0xf] %vm3, %v2
  %5 = vst.msk [vmem:[%s1] ss:$8 sm:$0xf0] %vm3, %v2
  %v6 = vld [vmem:[%s0] sm:$0xff]
  %7 = vrot.lane.b32.xlu0 %v6, 127
  %v8 = vpop.permute.xlu0 %7
  %vm9 = vcmask 7168
  %s10 = scalar_lea.vmem %s1, 1
  %11 = vst.msk [vmem:[%s10] ss:$8 sm:$0xf] %vm9, %v8
  %s12 = scalar_lea.vmem %s1, 1
  %13 = vst.msk [vmem:[%s12] ss:$8 sm:$0xf0] %vm9, %v8
  %v14 = vld [vmem:[%s0] sm:$0xff]
  %15 = vrot.lane.b32.xlu0 %v14, 126
  %v16 = vpop.permute.xlu0 %15
  %vm17 = vcmask 7168
  %s18 = scalar_lea.vmem %s1, 2
  %19 = vst.msk [vmem:[%s18] ss:$8 sm:$0xf] %vm17, %v16
  %s20 = scalar_lea.vmem %s1, 2
  %21 = vst.msk [vmem:[%s20] ss:$8 sm:$0xf0] %vm17, %v16
  %v22 = vld [vmem:[%s0] sm:$0xff]
  %23 = vrot.lane.b32.xlu0 %v22, 125
  %v24 = vpop.permute.xlu0 %23
  %vm25 = vcmask 7168
  %s26 = scalar_lea.vmem %s1, 3
  %27 = vst.msk [vmem:[%s26] ss:$8 sm:$0xf] %vm25, %v24
  %s28 = scalar_lea.vmem %s1, 3
  %29 = vst.msk [vmem:[%s28] ss:$8 sm:$0xf0] %vm25, %v24
  %v30 = vld [vmem:[%s0] sm:$0xff]
  %31 = vrot.lane.b32.xlu0 %v30, 124
  %v32 = vpop.permute.xlu0 %31
  %vm33 = vcmask 7168
  %s34 = scalar_lea.vmem %s1, 4
  %35 = vst.msk [vmem:[%s34] ss:$8 sm:$0xf] %vm33, %v32
  %s36 = scalar_lea.vmem %s1, 4
  %37 = vst.msk [vmem:[%s36] ss:$8 sm:$0xf0] %vm33, %v32
  %v38 = vld [vmem:[%s0] sm:$0xff]
  %39 = vrot.lane.b32.xlu0 %v38, 123
  %v40 = vpop.permute.xlu0 %39
  %vm41 = vcmask 7168
  %s42 = scalar_lea.vmem %s1, 5
  %43 = vst.msk [vmem:[%s42] ss:$8 sm:$0xf] %vm41, %v40
  %s44 = scalar_lea.vmem %s1, 5
  %45 = vst.msk [vmem:[%s44] ss:$8 sm:$0xf0] %vm41, %v40
  %v46 = vld [vmem:[%s0] sm:$0xff]
  %47 = vrot.lane.b32.xlu0 %v46, 122
  %v48 = vpop.permute.xlu0 %47
  %vm49 = vcmask 7168
  %s50 = scalar_lea.vmem %s1, 6
  %51 = vst.msk [vmem:[%s50] ss:$8 sm:$0xf] %vm49, %v48
  %s52 = scalar_lea.vmem %s1, 6
  %53 = vst.msk [vmem:[%s52] ss:$8 sm:$0xf0] %vm49, %v48
  %v54 = vld [vmem:[%s0] sm:$0xff]
  %55 = vrot.lane.b32.xlu0 %v54, 121
  %v56 = vpop.permute.xlu0 %55
  %vm57 = vcmask 7168
  %s58 = scalar_lea.vmem %s1, 7
  %59 = vst.msk [vmem:[%s58] ss:$8 sm:$0xf] %vm57, %v56
  %s60 = scalar_lea.vmem %s1, 7
  %61 = vst.msk [vmem:[%s60] ss:$8 sm:$0xf0] %vm57, %v56

// kernel: relation_classifier_forward.1
$region0: #{relation_classifier_forward.1}
  #allocation0 [shape = 'u32[]', space=smem, size = 0x4, offset = 0x4, fixed_abs, tag = 'smem constant byte address 0x4 - core index']
  #allocation1 [shape = 'u32[144,128]{1,0:T(1,128)}', space=vmem, size = 0x12000, scoped, tag = 'internal scratch']
  %s0 = inlined_call_operand.vmem [shape: bf16[256,128], index: 0, kind: input, shape index: {}]
  %s1 = inlined_call_operand.vmem [shape: bf16[256,256], index: 1, kind: input, shape index: {}]
  %s2 = inlined_call_operand.vmem [shape: f32[256,1], index: 2, kind: input, shape index: {}]
  %s3 = inlined_call_operand.vmem [shape: bf16[256,256], index: 3, kind: input, shape index: {}]
  %s4 = inlined_call_operand.vmem [shape: f32[256,1], index: 4, kind: input, shape index: {}]
  %s5 = inlined_call_operand.vmem [shape: bf16[64,256], index: 5, kind: input, shape index: {}]
  %s6 = inlined_call_operand.vmem [shape: f32[64,1], index: 6, kind: input, shape index: {}]
  %s7 = inlined_call_operand.vmem [shape: f32[8,8,128], index: 7, kind: output, shape index: {}]
  %s8 = sld [smem:[#allocation0]]
  $region38: #{relation_classifier_forward.1} parent=0
    _
  %s10 = ssub.s32 1, %s8
  %s11 = scalar_select 0, %s10, %s8
  // Predicated region
  $region2: #{relation_classifier_forward.1} parent=0 // pred_check
    _
  $region3: #{relation_classifier_forward.1} parent=0 // pred_check_branch
    %13 = sbr.rel (0) target = $region5
  $region4: #{relation_classifier_forward.1} parent=0 // pred_region
    _
  $region5: #{relation_classifier_forward.1} parent=0 // pred_fallthru
    _
  // Predicated region
  $region6: #{relation_classifier_forward.1} parent=0 // pred_check
    _
  $region7: #{relation_classifier_forward.1} parent=0 // pred_check_branch
    %15 = sbr.rel (0) target = $region9
  $region8: #{relation_classifier_forward.1} parent=0 // pred_region
    _
  $region9: #{relation_classifier_forward.1} parent=0 // pred_fallthru
    _
  // Predicated region
  $region10: #{relation_classifier_forward.1} parent=0 // pred_check
    _
  $region11: #{relation_classifier_forward.1} parent=0 // pred_check_branch
    %17 = sbr.rel (0) target = $region13
  $region12: #{relation_classifier_forward.1} parent=0 // pred_region
    _
  $region13: #{relation_classifier_forward.1} parent=0 // pred_fallthru
    _
  // Predicated region
  $region14: #{relation_classifier_forward.1} parent=0 // pred_check
    _
  $region15: #{relation_classifier_forward.1} parent=0 // pred_check_branch
    %19 = sbr.rel (0) target = $region17
  $region16: #{relation_classifier_forward.1} parent=0 // pred_region
    _
  $region17: #{relation_classifier_forward.1} parent=0 // pred_fallthru
    _
  // Predicated region
  $region18: #{relation_classifier_forward.1} parent=0 // pred_check
    _
  $region19: #{relation_classifier_forward.1} parent=0 // pred_check_branch
    %21 = sbr.rel (0) target = $region21
  $region20: #{relation_classifier_forward.1} parent=0 // pred_region
    _
  $region21: #{relation_classifier_forward.1} parent=0 // pred_fallthru
    _
  // Predicated region
  $region22: #{relation_classifier_forward.1} parent=0 // pred_check
    _
  $region23: #{relation_classifier_forward.1} parent=0 // pred_check_branch
    %23 = sbr.rel (0) target = $region25
  $region24: #{relation_classifier_forward.1} parent=0 // pred_region
    _
  $region25: #{relation_classifier_forward.1} parent=0 // pred_fallthru
    _
  // Predicated region
  $region26: #{relation_classifier_forward.1} parent=0 // pred_check
    _
  $region27: #{relation_classifier_forward.1} parent=0 // pred_check_branch
    %25 = sbr.rel (0) target = $region29
  $region28: #{relation_classifier_forward.1} parent=0 // pred_region
    _
  $region29: #{relation_classifier_forward.1} parent=0 // pred_fallthru
    _
  %v27 = vld [vmem:[%s0] sm:$0xf]
  %v28 = vld [vmem:[%s0 + $0x4] sm:$0xf]
  %v29 = vld [vmem:[%s0 + $0x8] sm:$0xf]
  %v30 = vld [vmem:[%s0 + $0xc] sm:$0xf]
  %v31 = vld [vmem:[%s0 + $0x10] sm:$0xf]
  %v32 = vld [vmem:[%s0 + $0x14] sm:$0xf]
  %v33 = vld [vmem:[%s0 + $0x18] sm:$0xf]
  %v34 = vld [vmem:[%s0 + $0x1c] sm:$0xf]
  %v35 = vld [vmem:[%s0 + $0x20] sm:$0xf]
  %v36 = vld [vmem:[%s0 + $0x24] sm:$0xf]
  %v37 = vld [vmem:[%s0 + $0x28] sm:$0xf]
  %v38 = vld [vmem:[%s0 + $0x2c] sm:$0xf]
  %v39 = vld [vmem:[%s0 + $0x30] sm:$0xf]
  %v40 = vld [vmem:[%s0 + $0x34] sm:$0xf]
  %v41 = vld [vmem:[%s0 + $0x38] sm:$0xf]
  %v42 = vld [vmem:[%s0 + $0x3c] sm:$0xf]
  %v43 = vld [vmem:[%s0 + $0x40] sm:$0xf]
  %v44 = vld [vmem:[%s0 + $0x44] sm:$0xf]
  %v45 = vld [vmem:[%s0 + $0x48] sm:$0xf]
  %v46 = vld [vmem:[%s0 + $0x4c] sm:$0xf]
  %v47 = vld [vmem:[%s0 + $0x50] sm:$0xf]
  %v48 = vld [vmem:[%s0 + $0x54] sm:$0xf]
  %v49 = vld [vmem:[%s0 + $0x58] sm:$0xf]
  %v50 = vld [vmem:[%s0 + $0x5c] sm:$0xf]
  %v51 = vld [vmem:[%s0 + $0x60] sm:$0xf]
  %v52 = vld [vmem:[%s0 + $0x64] sm:$0xf]
  %v53 = vld [vmem:[%s0 + $0x68] sm:$0xf]
  %v54 = vld [vmem:[%s0 + $0x6c] sm:$0xf]
  %v55 = vld [vmem:[%s0 + $0x70] sm:$0xf]
  %v56 = vld [vmem:[%s0 + $0x74] sm:$0xf]
  %v57 = vld [vmem:[%s0 + $0x78] sm:$0xf]
  %v58 = vld [vmem:[%s0 + $0x7c] sm:$0xf]
  %v59 = vld [vmem:[%s1] sm:$0xff]
  %v60 = vld [vmem:[%s1 + $0x8] sm:$0xff]
  %v61 = vld [vmem:[%s1 + $0x10] sm:$0xff]
  %v62 = vld [vmem:[%s1 + $0x18] sm:$0xff]
  %v63 = vld [vmem:[%s1 + $0x20] sm:$0xff]
  %v64 = vld [vmem:[%s1 + $0x28] sm:$0xff]
  %v65 = vld [vmem:[%s1 + $0x30] sm:$0xff]
  %v66 = vld [vmem:[%s1 + $0x38] sm:$0xff]
  %v67 = vld [vmem:[%s1 + $0x40] sm:$0xff]
  %v68 = vld [vmem:[%s1 + $0x48] sm:$0xff]
  %v69 = vld [vmem:[%s1 + $0x50] sm:$0xff]
  %v70 = vld [vmem:[%s1 + $0x58] sm:$0xff]
  %v71 = vld [vmem:[%s1 + $0x60] sm:$0xff]
  %v72 = vld [vmem:[%s1 + $0x68] sm:$0xff]
  %v73 = vld [vmem:[%s1 + $0x70] sm:$0xff]
  %v74 = vld [vmem:[%s1 + $0x78] sm:$0xff]
  %v75 = vld [vmem:[%s1 + $0x80] sm:$0xff]
  %v76 = vld [vmem:[%s1 + $0x88] sm:$0xff]
  %v77 = vld [vmem:[%s1 + $0x90] sm:$0xff]
  %v78 = vld [vmem:[%s1 + $0x98] sm:$0xff]
  %v79 = vld [vmem:[%s1 + $0xa0] sm:$0xff]
  %v80 = vld [vmem:[%s1 + $0xa8] sm:$0xff]
  %v81 = vld [vmem:[%s1 + $0xb0] sm:$0xff]
  %v82 = vld [vmem:[%s1 + $0xb8] sm:$0xff]
  %v83 = vld [vmem:[%s1 + $0xc0] sm:$0xff]
  %v84 = vld [vmem:[%s1 + $0xc8] sm:$0xff]
  %v85 = vld [vmem:[%s1 + $0xd0] sm:$0xff]
  %v86 = vld [vmem:[%s1 + $0xd8] sm:$0xff]
  %v87 = vld [vmem:[%s1 + $0xe0] sm:$0xff]
  %v88 = vld [vmem:[%s1 + $0xe8] sm:$0xff]
  %v89 = vld [vmem:[%s1 + $0xf0] sm:$0xff]
  %v90 = vld [vmem:[%s1 + $0xf8] sm:$0xff]
  %v91 = vld [vmem:[%s2] sm:$0xff]
  %v92 = vld [vmem:[%s2 + $0x8] sm:$0xff]
  %v93 = vld [vmem:[%s2 + $0x10] sm:$0xff]
  %v94 = vld [vmem:[%s2 + $0x18] sm:$0xff]
  %v95 = vld [vmem:[%s2 + $0x20] sm:$0xff]
  %v96 = vld [vmem:[%s2 + $0x28] sm:$0xff]
  %v97 = vld [vmem:[%s2 + $0x30] sm:$0xff]
  %v98 = vld [vmem:[%s2 + $0x38] sm:$0xff]
  %v99 = vld [vmem:[%s2 + $0x40] sm:$0xff]
  %v100 = vld [vmem:[%s2 + $0x48] sm:$0xff]
  %v101 = vld [vmem:[%s2 + $0x50] sm:$0xff]
  %v102 = vld [vmem:[%s2 + $0x58] sm:$0xff]
  %v103 = vld [vmem:[%s2 + $0x60] sm:$0xff]
  %v104 = vld [vmem:[%s2 + $0x68] sm:$0xff]
  %v105 = vld [vmem:[%s2 + $0x70] sm:$0xff]
  %v106 = vld [vmem:[%s2 + $0x78] sm:$0xff]
  %v107 = vld [vmem:[%s2 + $0x80] sm:$0xff]
  %v108 = vld [vmem:[%s2 + $0x88] sm:$0xff]
  %v109 = vld [vmem:[%s2 + $0x90] sm:$0xff]
  %v110 = vld [vmem:[%s2 + $0x98] sm:$0xff]
  %v111 = vld [vmem:[%s2 + $0xa0] sm:$0xff]
  %v112 = vld [vmem:[%s2 + $0xa8] sm:$0xff]
  %v113 = vld [vmem:[%s2 + $0xb0] sm:$0xff]
  %v114 = vld [vmem:[%s2 + $0xb8] sm:$0xff]
  %v115 = vld [vmem:[%s2 + $0xc0] sm:$0xff]
  %v116 = vld [vmem:[%s2 + $0xc8] sm:$0xff]
  %v117 = vld [vmem:[%s2 + $0xd0] sm:$0xff]
  %v118 = vld [vmem:[%s2 + $0xd8] sm:$0xff]
  %v119 = vld [vmem:[%s2 + $0xe0] sm:$0xff]
  %v120 = vld [vmem:[%s2 + $0xe8] sm:$0xff]
  %v121 = vld [vmem:[%s2 + $0xf0] sm:$0xff]
  %v122 = vld [vmem:[%s2 + $0xf8] sm:$0xff]
  %124 = vset.pattern.permute.xlu0 0
  %125 = vperm.xlu0 %124, %v91
  %v126 = vpop.permute.xlu0 %125
  %129 = vset.pattern.permute.xlu0 0
  %130 = vperm.xlu0 %129, %v92
  %v131 = vpop.permute.xlu0 %130
  %134 = vset.pattern.permute.xlu0 0
  %135 = vperm.xlu0 %134, %v93
  %v136 = vpop.permute.xlu0 %135
  %139 = vset.pattern.permute.xlu0 0
  %140 = vperm.xlu0 %139, %v94
  %v141 = vpop.permute.xlu0 %140
  %144 = vset.pattern.permute.xlu0 0
  %145 = vperm.xlu0 %144, %v95
  %v146 = vpop.permute.xlu0 %145
  %149 = vset.pattern.permute.xlu0 0
  %150 = vperm.xlu0 %149, %v96
  %v151 = vpop.permute.xlu0 %150
  %154 = vset.pattern.permute.xlu0 0
  %155 = vperm.xlu0 %154, %v97
  %v156 = vpop.permute.xlu0 %155
  %159 = vset.pattern.permute.xlu0 0
  %160 = vperm.xlu0 %159, %v98
  %v161 = vpop.permute.xlu0 %160
  %164 = vset.pattern.permute.xlu0 0
  %165 = vperm.xlu0 %164, %v99
  %v166 = vpop.permute.xlu0 %165
  %169 = vset.pattern.permute.xlu0 0
  %170 = vperm.xlu0 %169, %v100
  %v171 = vpop.permute.xlu0 %170
  %174 = vset.pattern.permute.xlu0 0
  %175 = vperm.xlu0 %174, %v101
  %v176 = vpop.permute.xlu0 %175
  %179 = vset.pattern.permute.xlu0 0
  %180 = vperm.xlu0 %179, %v102
  %v181 = vpop.permute.xlu0 %180
  %184 = vset.pattern.permute.xlu0 0
  %185 = vperm.xlu0 %184, %v103
  %v186 = vpop.permute.xlu0 %185
  %189 = vset.pattern.permute.xlu0 0
  %190 = vperm.xlu0 %189, %v104
  %v191 = vpop.permute.xlu0 %190
  %194 = vset.pattern.permute.xlu0 0
  %195 = vperm.xlu0 %194, %v105
  %v196 = vpop.permute.xlu0 %195
  %199 = vset.pattern.permute.xlu0 0
  %200 = vperm.xlu0 %199, %v106
  %v201 = vpop.permute.xlu0 %200
  %204 = vset.pattern.permute.xlu0 0
  %205 = vperm.xlu0 %204, %v107
  %v206 = vpop.permute.xlu0 %205
  %209 = vset.pattern.permute.xlu0 0
  %210 = vperm.xlu0 %209, %v108
  %v211 = vpop.permute.xlu0 %210
  %214 = vset.pattern.permute.xlu0 0
  %215 = vperm.xlu0 %214, %v109
  %v216 = vpop.permute.xlu0 %215
  %219 = vset.pattern.permute.xlu0 0
  %220 = vperm.xlu0 %219, %v110
  %v221 = vpop.permute.xlu0 %220
  %224 = vset.pattern.permute.xlu0 0
  %225 = vperm.xlu0 %224, %v111
  %v226 = vpop.permute.xlu0 %225
  %229 = vset.pattern.permute.xlu0 0
  %230 = vperm.xlu0 %229, %v112
  %v231 = vpop.permute.xlu0 %230
  %234 = vset.pattern.permute.xlu0 0
  %235 = vperm.xlu0 %234, %v113
  %v236 = vpop.permute.xlu0 %235
  %239 = vset.pattern.permute.xlu0 0
  %240 = vperm.xlu0 %239, %v114
  %v241 = vpop.permute.xlu0 %240
  %244 = vset.pattern.permute.xlu0 0
  %245 = vperm.xlu0 %244, %v115
  %v246 = vpop.permute.xlu0 %245
  %249 = vset.pattern.permute.xlu0 0
  %250 = vperm.xlu0 %249, %v116
  %v251 = vpop.permute.xlu0 %250
  %254 = vset.pattern.permute.xlu0 0
  %255 = vperm.xlu0 %254, %v117
  %v256 = vpop.permute.xlu0 %255
  %259 = vset.pattern.permute.xlu0 0
  %260 = vperm.xlu0 %259, %v118
  %v261 = vpop.permute.xlu0 %260
  %264 = vset.pattern.permute.xlu0 0
  %265 = vperm.xlu0 %264, %v119
  %v266 = vpop.permute.xlu0 %265
  %269 = vset.pattern.permute.xlu0 0
  %270 = vperm.xlu0 %269, %v120
  %v271 = vpop.permute.xlu0 %270
  %274 = vset.pattern.permute.xlu0 0
  %275 = vperm.xlu0 %274, %v121
  %v276 = vpop.permute.xlu0 %275
  %279 = vset.pattern.permute.xlu0 0
  %280 = vperm.xlu0 %279, %v122
  %v281 = vpop.permute.xlu0 %280
  %v315 = vunpack.c.l.b16 %v59
  %v316 = vunpack.c.h.b16 %v59
  %v317 = vunpack.c.l.b16 %v60
  %v318 = vunpack.c.h.b16 %v60
  %v319 = vunpack.c.l.b16 %v61
  %v320 = vunpack.c.h.b16 %v61
  %v321 = vunpack.c.l.b16 %v62
  %v322 = vunpack.c.h.b16 %v62
  %v323 = vunpack.c.l.b16 %v63
  %v324 = vunpack.c.h.b16 %v63
  %v325 = vunpack.c.l.b16 %v64
  %v326 = vunpack.c.h.b16 %v64
  %v327 = vunpack.c.l.b16 %v65
  %v328 = vunpack.c.h.b16 %v65
  %v329 = vunpack.c.l.b16 %v66
  %v330 = vunpack.c.h.b16 %v66
  %v331 = vunpack.c.l.b16 %v67
  %v332 = vunpack.c.h.b16 %v67
  %v333 = vunpack.c.l.b16 %v68
  %v334 = vunpack.c.h.b16 %v68
  %v335 = vunpack.c.l.b16 %v69
  %v336 = vunpack.c.h.b16 %v69
  %v337 = vunpack.c.l.b16 %v70
  %v338 = vunpack.c.h.b16 %v70
  %v339 = vunpack.c.l.b16 %v71
  %v340 = vunpack.c.h.b16 %v71
  %v341 = vunpack.c.l.b16 %v72
  %v342 = vunpack.c.h.b16 %v72
  %v343 = vunpack.c.l.b16 %v73
  %v344 = vunpack.c.h.b16 %v73
  %v345 = vunpack.c.l.b16 %v74
  %v346 = vunpack.c.h.b16 %v74
  %v347 = vunpack.c.l.b16 %v75
  %v348 = vunpack.c.h.b16 %v75
  %v349 = vunpack.c.l.b16 %v76
  %v350 = vunpack.c.h.b16 %v76
  %v351 = vunpack.c.l.b16 %v77
  %v352 = vunpack.c.h.b16 %v77
  %v353 = vunpack.c.l.b16 %v78
  %v354 = vunpack.c.h.b16 %v78
  %v355 = vunpack.c.l.b16 %v79
  %v356 = vunpack.c.h.b16 %v79
  %v357 = vunpack.c.l.b16 %v80
  %v358 = vunpack.c.h.b16 %v80
  %v359 = vunpack.c.l.b16 %v81
  %v360 = vunpack.c.h.b16 %v81
  %v361 = vunpack.c.l.b16 %v82
  %v362 = vunpack.c.h.b16 %v82
  %v363 = vunpack.c.l.b16 %v83
  %v364 = vunpack.c.h.b16 %v83
  %v365 = vunpack.c.l.b16 %v84
  %v366 = vunpack.c.h.b16 %v84
  %v367 = vunpack.c.l.b16 %v85
  %v368 = vunpack.c.h.b16 %v85
  %v369 = vunpack.c.l.b16 %v86
  %v370 = vunpack.c.h.b16 %v86
  %v371 = vunpack.c.l.b16 %v87
  %v372 = vunpack.c.h.b16 %v87
  %v373 = vunpack.c.l.b16 %v88
  %v374 = vunpack.c.h.b16 %v88
  %v375 = vunpack.c.l.b16 %v89
  %v376 = vunpack.c.h.b16 %v89
  %v377 = vunpack.c.l.b16 %v90
  %v378 = vunpack.c.h.b16 %v90
  %v379 = vpack.c.b16 %v317, %v315
  %v380 = vpack.c.b16 %v318, %v316
  %v381 = vpack.c.b16 %v321, %v319
  %v382 = vpack.c.b16 %v322, %v320
  %v383 = vpack.c.b16 %v325, %v323
  %v384 = vpack.c.b16 %v326, %v324
  %v385 = vpack.c.b16 %v329, %v327
  %v386 = vpack.c.b16 %v330, %v328
  %v387 = vpack.c.b16 %v333, %v331
  %v388 = vpack.c.b16 %v334, %v332
  %v389 = vpack.c.b16 %v337, %v335
  %v390 = vpack.c.b16 %v338, %v336
  %v391 = vpack.c.b16 %v341, %v339
  %v392 = vpack.c.b16 %v342, %v340
  %v393 = vpack.c.b16 %v345, %v343
  %v394 = vpack.c.b16 %v346, %v344
  %v395 = vpack.c.b16 %v349, %v347
  %v396 = vpack.c.b16 %v350, %v348
  %v397 = vpack.c.b16 %v353, %v351
  %v398 = vpack.c.b16 %v354, %v352
  %v399 = vpack.c.b16 %v357, %v355
  %v400 = vpack.c.b16 %v358, %v356
  %v401 = vpack.c.b16 %v361, %v359
  %v402 = vpack.c.b16 %v362, %v360
  %v403 = vpack.c.b16 %v365, %v363
  %v404 = vpack.c.b16 %v366, %v364
  %v405 = vpack.c.b16 %v369, %v367
  %v406 = vpack.c.b16 %v370, %v368
  %v407 = vpack.c.b16 %v373, %v371
  %v408 = vpack.c.b16 %v374, %v372
  %v409 = vpack.c.b16 %v377, %v375
  %v410 = vpack.c.b16 %v378, %v376
  %v475 = vunpack.c.l.b16 %v27
  %v476 = vunpack.c.l.b16 %v28
  %v477 = vunpack.c.l.b16 %v29
  %v478 = vunpack.c.l.b16 %v30
  %v479 = vunpack.c.l.b16 %v31
  %v480 = vunpack.c.l.b16 %v32
  %v481 = vunpack.c.l.b16 %v33
  %v482 = vunpack.c.l.b16 %v34
  %v483 = vunpack.c.l.b16 %v35
  %v484 = vunpack.c.l.b16 %v36
  %v485 = vunpack.c.l.b16 %v37
  %v486 = vunpack.c.l.b16 %v38
  %v487 = vunpack.c.l.b16 %v39
  %v488 = vunpack.c.l.b16 %v40
  %v489 = vunpack.c.l.b16 %v41
  %v490 = vunpack.c.l.b16 %v42
  %v491 = vunpack.c.l.b16 %v43
  %v492 = vunpack.c.l.b16 %v44
  %v493 = vunpack.c.l.b16 %v45
  %v494 = vunpack.c.l.b16 %v46
  %v495 = vunpack.c.l.b16 %v47
  %v496 = vunpack.c.l.b16 %v48
  %v497 = vunpack.c.l.b16 %v49
  %v498 = vunpack.c.l.b16 %v50
  %v499 = vunpack.c.l.b16 %v51
  %v500 = vunpack.c.l.b16 %v52
  %v501 = vunpack.c.l.b16 %v53
  %v502 = vunpack.c.l.b16 %v54
  %v503 = vunpack.c.l.b16 %v55
  %v504 = vunpack.c.l.b16 %v56
  %v505 = vunpack.c.l.b16 %v57
  %v506 = vunpack.c.l.b16 %v58
  %v507 = vpack.c.b16 %v476, %v475
  %v508 = vpack.c.b16 %v478, %v477
  %v509 = vpack.c.b16 %v480, %v479
  %v510 = vpack.c.b16 %v482, %v481
  %v511 = vpack.c.b16 %v484, %v483
  %v512 = vpack.c.b16 %v486, %v485
  %v513 = vpack.c.b16 %v488, %v487
  %v514 = vpack.c.b16 %v490, %v489
  %v515 = vpack.c.b16 %v492, %v491
  %v516 = vpack.c.b16 %v494, %v493
  %v517 = vpack.c.b16 %v496, %v495
  %v518 = vpack.c.b16 %v498, %v497
  %v519 = vpack.c.b16 %v500, %v499
  %v520 = vpack.c.b16 %v502, %v501
  %v521 = vpack.c.b16 %v504, %v503
  %v522 = vpack.c.b16 %v506, %v505
  %539 = vmatprep.subr.bf16.mxu0 0
  %540 = vmatpush1.bf16.msra.mxu0 %v507
  %541 = vmatprep.subr.bf16.mxu0 0
  %542 = vmatpush1.bf16.msra.mxu0 %v508
  %543 = vmatprep.subr.bf16.mxu0 0
  %544 = vmatpush1.bf16.msra.mxu0 %v509
  %545 = vmatprep.subr.bf16.mxu0 0
  %546 = vmatpush1.bf16.msra.mxu0 %v510
  %547 = vmatprep.subr.bf16.mxu0 0
  %548 = vmatpush1.bf16.msra.mxu0 %v511
  %549 = vmatprep.subr.bf16.mxu0 0
  %550 = vmatpush1.bf16.msra.mxu0 %v512
  %551 = vmatprep.subr.bf16.mxu0 0
  %552 = vmatpush1.bf16.msra.mxu0 %v513
  %553 = vmatprep.subr.bf16.mxu0 0
  %554 = vmatpush1.bf16.msra.mxu0 %v514
  %555 = vmatprep.subr.bf16.mxu0 0
  %556 = vmatpush1.bf16.msra.mxu0 %v515
  %557 = vmatprep.subr.bf16.mxu0 0
  %558 = vmatpush1.bf16.msra.mxu0 %v516
  %559 = vmatprep.subr.bf16.mxu0 0
  %560 = vmatpush1.bf16.msra.mxu0 %v517
  %561 = vmatprep.subr.bf16.mxu0 0
  %562 = vmatpush1.bf16.msra.mxu0 %v518
  %563 = vmatprep.subr.bf16.mxu0 0
  %564 = vmatpush1.bf16.msra.mxu0 %v519
  %565 = vmatprep.subr.bf16.mxu0 0
  %566 = vmatpush1.bf16.msra.mxu0 %v520
  %567 = vmatprep.subr.bf16.mxu0 0
  %568 = vmatpush1.bf16.msra.mxu0 %v521
  %569 = vmatprep.subr.bf16.mxu0 0
  %570 = vmatpush1.bf16.msra.mxu0 %v522
  %571 = vmatprep.mubr.bf16.mxu0 %v380
  %572 = vmatmul.mubr.bf16.gmra.mrb[0].mxu0 %v379
  %v573 = vpop.f32.mrb[0].mxu0
  %v574 = vadd.f32 %v126, %v573
  %v575 = vpop.f32.mrb[0].mxu0
  %v576 = vpop.f32.mrb[0].mxu0
  %v577 = vadd.f32 %v131, %v576
  %v578 = vpop.f32.mrb[0].mxu0
  %579 = vmatprep.mubr.bf16.mxu0 %v382
  %580 = vmatmul.mubr.bf16.gmra.mrb[0].mxu0 %v381
  %v581 = vpop.f32.mrb[0].mxu0
  %v582 = vadd.f32 %v136, %v581
  %v583 = vpop.f32.mrb[0].mxu0
  %v584 = vpop.f32.mrb[0].mxu0
  %v585 = vadd.f32 %v141, %v584
  %v586 = vpop.f32.mrb[0].mxu0
  %587 = vmatprep.mubr.bf16.mxu0 %v384
  %588 = vmatmul.mubr.bf16.gmra.mrb[0].mxu0 %v383
  %v589 = vpop.f32.mrb[0].mxu0
  %v590 = vadd.f32 %v146, %v589
  %v591 = vpop.f32.mrb[0].mxu0
  %v592 = vpop.f32.mrb[0].mxu0
  %v593 = vadd.f32 %v151, %v592
  %v594 = vpop.f32.mrb[0].mxu0
  %595 = vmatprep.mubr.bf16.mxu0 %v386
  %596 = vmatmul.mubr.bf16.gmra.mrb[0].mxu0 %v385
  %v597 = vpop.f32.mrb[0].mxu0
  %v598 = vadd.f32 %v156, %v597
  %v599 = vpop.f32.mrb[0].mxu0
  %v600 = vpop.f32.mrb[0].mxu0
  %v601 = vadd.f32 %v161, %v600
  %v602 = vpop.f32.mrb[0].mxu0
  %603 = vmatprep.mubr.bf16.mxu0 %v388
  %604 = vmatmul.mubr.bf16.gmra.mrb[0].mxu0 %v387
  %v605 = vpop.f32.mrb[0].mxu0
  %v606 = vadd.f32 %v166, %v605
  %v607 = vpop.f32.mrb[0].mxu0
  %v608 = vpop.f32.mrb[0].mxu0
  %v609 = vadd.f32 %v171, %v608
  %v610 = vpop.f32.mrb[0].mxu0
  %611 = vmatprep.mubr.bf16.mxu0 %v390
  %612 = vmatmul.mubr.bf16.gmra.mrb[0].mxu0 %v389
  %v613 = vpop.f32.mrb[0].mxu0
  %v614 = vadd.f32 %v176, %v613
  %v615 = vpop.f32.mrb[0].mxu0
  %v616 = vpop.f32.mrb[0].mxu0
  %v617 = vadd.f32 %v181, %v616
  %v618 = vpop.f32.mrb[0].mxu0
  %619 = vmatprep.mubr.bf16.mxu0 %v392
  %620 = vmatmul.mubr.bf16.gmra.mrb[0].mxu0 %v391
  %v621 = vpop.f32.mrb[0].mxu0
  %v622 = vadd.f32 %v186, %v621
  %v623 = vpop.f32.mrb[0].mxu0
  %v624 = vpop.f32.mrb[0].mxu0
  %v625 = vadd.f32 %v191, %v624
  %v626 = vpop.f32.mrb[0].mxu0
  %627 = vmatprep.mubr.bf16.mxu0 %v394
  %628 = vmatmul.mubr.bf16.gmra.mrb[0].mxu0 %v393
  %v629 = vpop.f32.mrb[0].mxu0
  %v630 = vadd.f32 %v196, %v629
  %v631 = vpop.f32.mrb[0].mxu0
  %v632 = vpop.f32.mrb[0].mxu0
  %v633 = vadd.f32 %v201, %v632
  %v634 = vpop.f32.mrb[0].mxu0
  %635 = vmatprep.mubr.bf16.mxu0 %v396
  %636 = vmatmul.mubr.bf16.gmra.mrb[0].mxu0 %v395
  %v637 = vpop.f32.mrb[0].mxu0
  %v638 = vadd.f32 %v206, %v637
  %v639 = vpop.f32.mrb[0].mxu0
  %v640 = vpop.f32.mrb[0].mxu0
  %v641 = vadd.f32 %v211, %v640
  %v642 = vpop.f32.mrb[0].mxu0
  %643 = vmatprep.mubr.bf16.mxu0 %v398
  %644 = vmatmul.mubr.bf16.gmra.mrb[0].mxu0 %v397
  %v645 = vpop.f32.mrb[0].mxu0
  %v646 = vadd.f32 %v216, %v645
  %v647 = vpop.f32.mrb[0].mxu0
  %v648 = vpop.f32.mrb[0].mxu0
  %v649 = vadd.f32 %v221, %v648
  %v650 = vpop.f32.mrb[0].mxu0
  %651 = vmatprep.mubr.bf16.mxu0 %v400
  %652 = vmatmul.mubr.bf16.gmra.mrb[0].mxu0 %v399
  %v653 = vpop.f32.mrb[0].mxu0
  %v654 = vadd.f32 %v226, %v653
  %v655 = vpop.f32.mrb[0].mxu0
  %v656 = vpop.f32.mrb[0].mxu0
  %v657 = vadd.f32 %v231, %v656
  %v658 = vpop.f32.mrb[0].mxu0
  %659 = vmatprep.mubr.bf16.mxu0 %v402
  %660 = vmatmul.mubr.bf16.gmra.mrb[0].mxu0 %v401
  %v661 = vpop.f32.mrb[0].mxu0
  %v662 = vadd.f32 %v236, %v661
  %v663 = vpop.f32.mrb[0].mxu0
  %v664 = vpop.f32.mrb[0].mxu0
  %v665 = vadd.f32 %v241, %v664
  %v666 = vpop.f32.mrb[0].mxu0
  %667 = vmatprep.mubr.bf16.mxu0 %v404
  %668 = vmatmul.mubr.bf16.gmra.mrb[0].mxu0 %v403
  %v669 = vpop.f32.mrb[0].mxu0
  %v670 = vadd.f32 %v246, %v669
  %v671 = vpop.f32.mrb[0].mxu0
  %v672 = vpop.f32.mrb[0].mxu0
  %v673 = vadd.f32 %v251, %v672
  %v674 = vpop.f32.mrb[0].mxu0
  %675 = vmatprep.mubr.bf16.mxu0 %v406
  %676 = vmatmul.mubr.bf16.gmra.mrb[0].mxu0 %v405
  %v677 = vpop.f32.mrb[0].mxu0
  %v678 = vadd.f32 %v256, %v677
  %v679 = vpop.f32.mrb[0].mxu0
  %v680 = vpop.f32.mrb[0].mxu0
  %v681 = vadd.f32 %v261, %v680
  %v682 = vpop.f32.mrb[0].mxu0
  %683 = vmatprep.mubr.bf16.mxu0 %v408
  %684 = vmatmul.mubr.bf16.gmra.mrb[0].mxu0 %v407
  %v685 = vpop.f32.mrb[0].mxu0
  %v686 = vadd.f32 %v266, %v685
  %v687 = vpop.f32.mrb[0].mxu0
  %v688 = vpop.f32.mrb[0].mxu0
  %v689 = vadd.f32 %v271, %v688
  %v690 = vpop.f32.mrb[0].mxu0
  %691 = vmatprep.mubr.bf16.mxu0 %v410
  %692 = vmatmul.mubr.bf16.gmra.mrb[0].mxu0 %v409
  %v693 = vpop.f32.mrb[0].mxu0
  %v694 = vadd.f32 %v276, %v693
  %v695 = vpop.f32.mrb[0].mxu0
  %v696 = vpop.f32.mrb[0].mxu0
  %v697 = vadd.f32 %v281, %v696
  %v698 = vpop.f32.mrb[0].mxu0
  %699 = vdwg.mxu0
  %v700 = vmax.f32 %v574, 0.0
  %v701 = vmax.f32 %v577, 0.0
  %v702 = vmax.f32 %v582, 0.0
  %v703 = vmax.f32 %v585, 0.0
  %v704 = vmax.f32 %v590, 0.0
  %v705 = vmax.f32 %v593, 0.0
  %v706 = vmax.f32 %v598, 0.0
  %v707 = vmax.f32 %v601, 0.0
  %v708 = vmax.f32 %v606, 0.0
  %v709 = vmax.f32 %v609, 0.0
  %v710 = vmax.f32 %v614, 0.0
  %v711 = vmax.f32 %v617, 0.0
  %v712 = vmax.f32 %v622, 0.0
  %v713 = vmax.f32 %v625, 0.0
  %v714 = vmax.f32 %v630, 0.0
  %v715 = vmax.f32 %v633, 0.0
  %v716 = vmax.f32 %v638, 0.0
  %v717 = vmax.f32 %v641, 0.0
  %v718 = vmax.f32 %v646, 0.0
  %v719 = vmax.f32 %v649, 0.0
  %v720 = vmax.f32 %v654, 0.0
  %v721 = vmax.f32 %v657, 0.0
  %v722 = vmax.f32 %v662, 0.0
  %v723 = vmax.f32 %v665, 0.0
  %v724 = vmax.f32 %v670, 0.0
  %v725 = vmax.f32 %v673, 0.0
  %v726 = vmax.f32 %v678, 0.0
  %v727 = vmax.f32 %v681, 0.0
  %v728 = vmax.f32 %v686, 0.0
  %v729 = vmax.f32 %v689, 0.0
  %v730 = vmax.f32 %v694, 0.0
  %v731 = vmax.f32 %v697, 0.0
  %v732 = vpack.c.bf16 %v701, %v700
  %v733 = vpack.c.bf16 %v703, %v702
  %v734 = vpack.c.bf16 %v705, %v704
  %v735 = vpack.c.bf16 %v707, %v706
  %v736 = vpack.c.bf16 %v709, %v708
  %v737 = vpack.c.bf16 %v711, %v710
  %v738 = vpack.c.bf16 %v713, %v712
  %v739 = vpack.c.bf16 %v715, %v714
  %v740 = vpack.c.bf16 %v717, %v716
  %v741 = vpack.c.bf16 %v719, %v718
  %v742 = vpack.c.bf16 %v721, %v720
  %v743 = vpack.c.bf16 %v723, %v722
  %v744 = vpack.c.bf16 %v725, %v724
  %v745 = vpack.c.bf16 %v727, %v726
  %v746 = vpack.c.bf16 %v729, %v728
  %v747 = vpack.c.bf16 %v731, %v730
  %v748 = vld [vmem:[%s3] sm:$0xff]
  %v749 = vld [vmem:[%s3 + $0x8] sm:$0xff]
  %v750 = vld [vmem:[%s3 + $0x10] sm:$0xff]
  %v751 = vld [vmem:[%s3 + $0x18] sm:$0xff]
  %v752 = vld [vmem:[%s3 + $0x20] sm:$0xff]
  %v753 = vld [vmem:[%s3 + $0x28] sm:$0xff]
  %v754 = vld [vmem:[%s3 + $0x30] sm:$0xff]
  %v755 = vld [vmem:[%s3 + $0x38] sm:$0xff]
  %v756 = vld [vmem:[%s3 + $0x40] sm:$0xff]
  %v757 = vld [vmem:[%s3 + $0x48] sm:$0xff]
  %v758 = vld [vmem:[%s3 + $0x50] sm:$0xff]
  %v759 = vld [vmem:[%s3 + $0x58] sm:$0xff]
  %v760 = vld [vmem:[%s3 + $0x60] sm:$0xff]
  %v761 = vld [vmem:[%s3 + $0x68] sm:$0xff]
  %v762 = vld [vmem:[%s3 + $0x70] sm:$0xff]
  %v763 = vld [vmem:[%s3 + $0x78] sm:$0xff]
  %v764 = vld [vmem:[%s3 + $0x80] sm:$0xff]
  %v765 = vld [vmem:[%s3 + $0x88] sm:$0xff]
  %v766 = vld [vmem:[%s3 + $0x90] sm:$0xff]
  %v767 = vld [vmem:[%s3 + $0x98] sm:$0xff]
  %v768 = vld [vmem:[%s3 + $0xa0] sm:$0xff]
  %v769 = vld [vmem:[%s3 + $0xa8] sm:$0xff]
  %v770 = vld [vmem:[%s3 + $0xb0] sm:$0xff]
  %v771 = vld [vmem:[%s3 + $0xb8] sm:$0xff]
  %v772 = vld [vmem:[%s3 + $0xc0] sm:$0xff]
  %v773 = vld [vmem:[%s3 + $0xc8] sm:$0xff]
  %v774 = vld [vmem:[%s3 + $0xd0] sm:$0xff]
  %v775 = vld [vmem:[%s3 + $0xd8] sm:$0xff]
  %v776 = vld [vmem:[%s3 + $0xe0] sm:$0xff]
  %v777 = vld [vmem:[%s3 + $0xe8] sm:$0xff]
  %v778 = vld [vmem:[%s3 + $0xf0] sm:$0xff]
  %v779 = vld [vmem:[%s3 + $0xf8] sm:$0xff]
  %v780 = vld [vmem:[%s4] sm:$0xff]
  %v781 = vld [vmem:[%s4 + $0x8] sm:$0xff]
  %v782 = vld [vmem:[%s4 + $0x10] sm:$0xff]
  %v783 = vld [vmem:[%s4 + $0x18] sm:$0xff]
  %v784 = vld [vmem:[%s4 + $0x20] sm:$0xff]
  %v785 = vld [vmem:[%s4 + $0x28] sm:$0xff]
  %v786 = vld [vmem:[%s4 + $0x30] sm:$0xff]
  %v787 = vld [vmem:[%s4 + $0x38] sm:$0xff]
  %v788 = vld [vmem:[%s4 + $0x40] sm:$0xff]
  %v789 = vld [vmem:[%s4 + $0x48] sm:$0xff]
  %v790 = vld [vmem:[%s4 + $0x50] sm:$0xff]
  %v791 = vld [vmem:[%s4 + $0x58] sm:$0xff]
  %v792 = vld [vmem:[%s4 + $0x60] sm:$0xff]
  %v793 = vld [vmem:[%s4 + $0x68] sm:$0xff]
  %v794 = vld [vmem:[%s4 + $0x70] sm:$0xff]
  %v795 = vld [vmem:[%s4 + $0x78] sm:$0xff]
  %v796 = vld [vmem:[%s4 + $0x80] sm:$0xff]
  %v797 = vld [vmem:[%s4 + $0x88] sm:$0xff]
  %v798 = vld [vmem:[%s4 + $0x90] sm:$0xff]
  %v799 = vld [vmem:[%s4 + $0x98] sm:$0xff]
  %v800 = vld [vmem:[%s4 + $0xa0] sm:$0xff]
  %v801 = vld [vmem:[%s4 + $0xa8] sm:$0xff]
  %v802 = vld [vmem:[%s4 + $0xb0] sm:$0xff]
  %v803 = vld [vmem:[%s4 + $0xb8] sm:$0xff]
  %v804 = vld [vmem:[%s4 + $0xc0] sm:$0xff]
  %v805 = vld [vmem:[%s4 + $0xc8] sm:$0xff]
  %v806 = vld [vmem:[%s4 + $0xd0] sm:$0xff]
  %v807 = vld [vmem:[%s4 + $0xd8] sm:$0xff]
  %v808 = vld [vmem:[%s4 + $0xe0] sm:$0xff]
  %v809 = vld [vmem:[%s4 + $0xe8] sm:$0xff]
  %v810 = vld [vmem:[%s4 + $0xf0] sm:$0xff]
  %v811 = vld [vmem:[%s4 + $0xf8] sm:$0xff]
  %813 = vset.pattern.permute.xlu0 0
  %814 = vperm.xlu0 %813, %v780
  %v815 = vpop.permute.xlu0 %814
  %818 = vset.pattern.permute.xlu0 0
  %819 = vperm.xlu0 %818, %v781
  %v820 = vpop.permute.xlu0 %819
  %823 = vset.pattern.permute.xlu0 0
  %824 = vperm.xlu0 %823, %v782
  %v825 = vpop.permute.xlu0 %824
  %828 = vset.pattern.permute.xlu0 0
  %829 = vperm.xlu0 %828, %v783
  %v830 = vpop.permute.xlu0 %829
  %833 = vset.pattern.permute.xlu0 0
  %834 = vperm.xlu0 %833, %v784
  %v835 = vpop.permute.xlu0 %834
  %838 = vset.pattern.permute.xlu0 0
  %839 = vperm.xlu0 %838, %v785
  %v840 = vpop.permute.xlu0 %839
  %843 = vset.pattern.permute.xlu0 0
  %844 = vperm.xlu0 %843, %v786
  %v845 = vpop.permute.xlu0 %844
  %848 = vset.pattern.permute.xlu0 0
  %849 = vperm.xlu0 %848, %v787
  %v850 = vpop.permute.xlu0 %849
  %853 = vset.pattern.permute.xlu0 0
  %854 = vperm.xlu0 %853, %v788
  %v855 = vpop.permute.xlu0 %854
  %858 = vset.pattern.permute.xlu0 0
  %859 = vperm.xlu0 %858, %v789
  %v860 = vpop.permute.xlu0 %859
  %863 = vset.pattern.permute.xlu0 0
  %864 = vperm.xlu0 %863, %v790
  %v865 = vpop.permute.xlu0 %864
  %868 = vset.pattern.permute.xlu0 0
  %869 = vperm.xlu0 %868, %v791
  %v870 = vpop.permute.xlu0 %869
  %873 = vset.pattern.permute.xlu0 0
  %874 = vperm.xlu0 %873, %v792
  %v875 = vpop.permute.xlu0 %874
  %878 = vset.pattern.permute.xlu0 0
  %879 = vperm.xlu0 %878, %v793
  %v880 = vpop.permute.xlu0 %879
  %883 = vset.pattern.permute.xlu0 0
  %884 = vperm.xlu0 %883, %v794
  %v885 = vpop.permute.xlu0 %884
  %888 = vset.pattern.permute.xlu0 0
  %889 = vperm.xlu0 %888, %v795
  %v890 = vpop.permute.xlu0 %889
  %893 = vset.pattern.permute.xlu0 0
  %894 = vperm.xlu0 %893, %v796
  %v895 = vpop.permute.xlu0 %894
  %898 = vset.pattern.permute.xlu0 0
  %899 = vperm.xlu0 %898, %v797
  %v900 = vpop.permute.xlu0 %899
  %903 = vset.pattern.permute.xlu0 0
  %904 = vperm.xlu0 %903, %v798
  %v905 = vpop.permute.xlu0 %904
  %908 = vset.pattern.permute.xlu0 0
  %909 = vperm.xlu0 %908, %v799
  %v910 = vpop.permute.xlu0 %909
  %913 = vset.pattern.permute.xlu0 0
  %914 = vperm.xlu0 %913, %v800
  %v915 = vpop.permute.xlu0 %914
  %918 = vset.pattern.permute.xlu0 0
  %919 = vperm.xlu0 %918, %v801
  %v920 = vpop.permute.xlu0 %919
  %923 = vset.pattern.permute.xlu0 0
  %924 = vperm.xlu0 %923, %v802
  %v925 = vpop.permute.xlu0 %924
  %928 = vset.pattern.permute.xlu0 0
  %929 = vperm.xlu0 %928, %v803
  %v930 = vpop.permute.xlu0 %929
  %933 = vset.pattern.permute.xlu0 0
  %934 = vperm.xlu0 %933, %v804
  %v935 = vpop.permute.xlu0 %934
  %938 = vset.pattern.permute.xlu0 0
  %939 = vperm.xlu0 %938, %v805
  %v940 = vpop.permute.xlu0 %939
  %943 = vset.pattern.permute.xlu0 0
  %944 = vperm.xlu0 %943, %v806
  %v945 = vpop.permute.xlu0 %944
  %948 = vset.pattern.permute.xlu0 0
  %949 = vperm.xlu0 %948, %v807
  %v950 = vpop.permute.xlu0 %949
  %953 = vset.pattern.permute.xlu0 0
  %954 = vperm.xlu0 %953, %v808
  %v955 = vpop.permute.xlu0 %954
  %958 = vset.pattern.permute.xlu0 0
  %959 = vperm.xlu0 %958, %v809
  %v960 = vpop.permute.xlu0 %959
  %963 = vset.pattern.permute.xlu0 0
  %964 = vperm.xlu0 %963, %v810
  %v965 = vpop.permute.xlu0 %964
  %968 = vset.pattern.permute.xlu0 0
  %969 = vperm.xlu0 %968, %v811
  %v970 = vpop.permute.xlu0 %969
  %v1004 = vunpack.c.l.b16 %v748
  %v1005 = vunpack.c.h.b16 %v748
  %v1006 = vunpack.c.l.b16 %v749
  %v1007 = vunpack.c.h.b16 %v749
  %v1008 = vunpack.c.l.b16 %v750
  %v1009 = vunpack.c.h.b16 %v750
  %v1010 = vunpack.c.l.b16 %v751
  %v1011 = vunpack.c.h.b16 %v751
  %v1012 = vunpack.c.l.b16 %v752
  %v1013 = vunpack.c.h.b16 %v752
  %v1014 = vunpack.c.l.b16 %v753
  %v1015 = vunpack.c.h.b16 %v753
  %v1016 = vunpack.c.l.b16 %v754
  %v1017 = vunpack.c.h.b16 %v754
  %v1018 = vunpack.c.l.b16 %v755
  %v1019 = vunpack.c.h.b16 %v755
  %v1020 = vunpack.c.l.b16 %v756
  %v1021 = vunpack.c.h.b16 %v756
  %v1022 = vunpack.c.l.b16 %v757
  %v1023 = vunpack.c.h.b16 %v757
  %v1024 = vunpack.c.l.b16 %v758
  %v1025 = vunpack.c.h.b16 %v758
  %v1026 = vunpack.c.l.b16 %v759
  %v1027 = vunpack.c.h.b16 %v759
  %v1028 = vunpack.c.l.b16 %v760
  %v1029 = vunpack.c.h.b16 %v760
  %v1030 = vunpack.c.l.b16 %v761
  %v1031 = vunpack.c.h.b16 %v761
  %v1032 = vunpack.c.l.b16 %v762
  %v1033 = vunpack.c.h.b16 %v762
  %v1034 = vunpack.c.l.b16 %v763
  %v1035 = vunpack.c.h.b16 %v763
  %v1036 = vunpack.c.l.b16 %v764
  %v1037 = vunpack.c.h.b16 %v764
  %v1038 = vunpack.c.l.b16 %v765
  %v1039 = vunpack.c.h.b16 %v765
  %v1040 = vunpack.c.l.b16 %v766
  %v1041 = vunpack.c.h.b16 %v766
  %v1042 = vunpack.c.l.b16 %v767
  %v1043 = vunpack.c.h.b16 %v767
  %v1044 = vunpack.c.l.b16 %v768
  %v1045 = vunpack.c.h.b16 %v768
  %v1046 = vunpack.c.l.b16 %v769
  %v1047 = vunpack.c.h.b16 %v769
  %v1048 = vunpack.c.l.b16 %v770
  %v1049 = vunpack.c.h.b16 %v770
  %v1050 = vunpack.c.l.b16 %v771
  %v1051 = vunpack.c.h.b16 %v771
  %v1052 = vunpack.c.l.b16 %v772
  %v1053 = vunpack.c.h.b16 %v772
  %v1054 = vunpack.c.l.b16 %v773
  %v1055 = vunpack.c.h.b16 %v773
  %v1056 = vunpack.c.l.b16 %v774
  %v1057 = vunpack.c.h.b16 %v774
  %v1058 = vunpack.c.l.b16 %v775
  %v1059 = vunpack.c.h.b16 %v775
  %v1060 = vunpack.c.l.b16 %v776
  %v1061 = vunpack.c.h.b16 %v776
  %v1062 = vunpack.c.l.b16 %v777
  %v1063 = vunpack.c.h.b16 %v777
  %v1064 = vunpack.c.l.b16 %v778
  %v1065 = vunpack.c.h.b16 %v778
  %v1066 = vunpack.c.l.b16 %v779
  %v1067 = vunpack.c.h.b16 %v779
  %v1068 = vpack.c.b16 %v1006, %v1004
  %v1069 = vpack.c.b16 %v1007, %v1005
  %v1070 = vpack.c.b16 %v1010, %v1008
  %v1071 = vpack.c.b16 %v1011, %v1009
  %v1072 = vpack.c.b16 %v1014, %v1012
  %v1073 = vpack.c.b16 %v1015, %v1013
  %v1074 = vpack.c.b16 %v1018, %v1016
  %v1075 = vpack.c.b16 %v1019, %v1017
  %v1076 = vpack.c.b16 %v1022, %v1020
  %v1077 = vpack.c.b16 %v1023, %v1021
  %v1078 = vpack.c.b16 %v1026, %v1024
  %v1079 = vpack.c.b16 %v1027, %v1025
  %v1080 = vpack.c.b16 %v1030, %v1028
  %v1081 = vpack.c.b16 %v1031, %v1029
  %v1082 = vpack.c.b16 %v1034, %v1032
  %v1083 = vpack.c.b16 %v1035, %v1033
  %v1084 = vpack.c.b16 %v1038, %v1036
  %v1085 = vpack.c.b16 %v1039, %v1037
  %v1086 = vpack.c.b16 %v1042, %v1040
  %v1087 = vpack.c.b16 %v1043, %v1041
  %v1088 = vpack.c.b16 %v1046, %v1044
  %v1089 = vpack.c.b16 %v1047, %v1045
  %v1090 = vpack.c.b16 %v1050, %v1048
  %v1091 = vpack.c.b16 %v1051, %v1049
  %v1092 = vpack.c.b16 %v1054, %v1052
  %v1093 = vpack.c.b16 %v1055, %v1053
  %v1094 = vpack.c.b16 %v1058, %v1056
  %v1095 = vpack.c.b16 %v1059, %v1057
  %v1096 = vpack.c.b16 %v1062, %v1060
  %v1097 = vpack.c.b16 %v1063, %v1061
  %v1098 = vpack.c.b16 %v1066, %v1064
  %v1099 = vpack.c.b16 %v1067, %v1065
  %1132 = vmatprep.subr.bf16.mxu0 0
  %1133 = vmatpush1.bf16.msra.mxu0 %v732
  %1134 = vmatprep.subr.bf16.mxu0 0
  %1135 = vmatpush1.bf16.msra.mxu0 %v733
  %1136 = vmatprep.subr.bf16.mxu0 0
  %1137 = vmatpush1.bf16.msra.mxu0 %v734
  %1138 = vmatprep.subr.bf16.mxu0 0
  %1139 = vmatpush1.bf16.msra.mxu0 %v735
  %1140 = vmatprep.subr.bf16.mxu0 0
  %1141 = vmatpush1.bf16.msra.mxu0 %v736
  %1142 = vmatprep.subr.bf16.mxu0 0
  %1143 = vmatpush1.bf16.msra.mxu0 %v737
  %1144 = vmatprep.subr.bf16.mxu0 0
  %1145 = vmatpush1.bf16.msra.mxu0 %v738
  %1146 = vmatprep.subr.bf16.mxu0 0
  %1147 = vmatpush1.bf16.msra.mxu0 %v739
  %1148 = vmatprep.subr.bf16.mxu0 0
  %1149 = vmatpush1.bf16.msra.mxu0 %v740
  %1150 = vmatprep.subr.bf16.mxu0 0
  %1151 = vmatpush1.bf16.msra.mxu0 %v741
  %1152 = vmatprep.subr.bf16.mxu0 0
  %1153 = vmatpush1.bf16.msra.mxu0 %v742
  %1154 = vmatprep.subr.bf16.mxu0 0
  %1155 = vmatpush1.bf16.msra.mxu0 %v743
  %1156 = vmatprep.subr.bf16.mxu0 0
  %1157 = vmatpush1.bf16.msra.mxu0 %v744
  %1158 = vmatprep.subr.bf16.mxu0 0
  %1159 = vmatpush1.bf16.msra.mxu0 %v745
  %1160 = vmatprep.subr.bf16.mxu0 0
  %1161 = vmatpush1.bf16.msra.mxu0 %v746
  %1162 = vmatprep.subr.bf16.mxu0 0
  %1163 = vmatpush1.bf16.msra.mxu0 %v747
  %1164 = vmatprep.mubr.bf16.mxu0 %v1069
  %1165 = vmatmul.mubr.bf16.gmra.mrb[0].mxu0 %v1068
  %v1166 = vpop.f32.mrb[0].mxu0
  %v1167 = vadd.f32 %v815, %v1166
  %v1168 = vpop.f32.mrb[0].mxu0
  %v1169 = vpop.f32.mrb[0].mxu0
  %v1170 = vadd.f32 %v820, %v1169
  %v1171 = vpop.f32.mrb[0].mxu0
  %1172 = vmatprep.mubr.bf16.mxu0 %v1071
  %1173 = vmatmul.mubr.bf16.gmra.mrb[0].mxu0 %v1070
  %v1174 = vpop.f32.mrb[0].mxu0
  %v1175 = vadd.f32 %v825, %v1174
  %v1176 = vpop.f32.mrb[0].mxu0
  %v1177 = vpop.f32.mrb[0].mxu0
  %v1178 = vadd.f32 %v830, %v1177
  %v1179 = vpop.f32.mrb[0].mxu0
  %1180 = vmatprep.mubr.bf16.mxu0 %v1073
  %1181 = vmatmul.mubr.bf16.gmra.mrb[0].mxu0 %v1072
  %v1182 = vpop.f32.mrb[0].mxu0
  %v1183 = vadd.f32 %v835, %v1182
  %v1184 = vpop.f32.mrb[0].mxu0
  %v1185 = vpop.f32.mrb[0].mxu0
  %v1186 = vadd.f32 %v840, %v1185
  %v1187 = vpop.f32.mrb[0].mxu0
  %1188 = vmatprep.mubr.bf16.mxu0 %v1075
  %1189 = vmatmul.mubr.bf16.gmra.mrb[0].mxu0 %v1074
  %v1190 = vpop.f32.mrb[0].mxu0
  %v1191 = vadd.f32 %v845, %v1190
  %v1192 = vpop.f32.mrb[0].mxu0
  %v1193 = vpop.f32.mrb[0].mxu0
  %v1194 = vadd.f32 %v850, %v1193
  %v1195 = vpop.f32.mrb[0].mxu0
  %1196 = vmatprep.mubr.bf16.mxu0 %v1077
  %1197 = vmatmul.mubr.bf16.gmra.mrb[0].mxu0 %v1076
  %v1198 = vpop.f32.mrb[0].mxu0
  %v1199 = vadd.f32 %v855, %v1198
  %v1200 = vpop.f32.mrb[0].mxu0
  %v1201 = vpop.f32.mrb[0].mxu0
  %v1202 = vadd.f32 %v860, %v1201
  %v1203 = vpop.f32.mrb[0].mxu0
  %1204 = vmatprep.mubr.bf16.mxu0 %v1079
  %1205 = vmatmul.mubr.bf16.gmra.mrb[0].mxu0 %v1078
  %v1206 = vpop.f32.mrb[0].mxu0
  %v1207 = vadd.f32 %v865, %v1206
  %v1208 = vpop.f32.mrb[0].mxu0
  %v1209 = vpop.f32.mrb[0].mxu0
  %v1210 = vadd.f32 %v870, %v1209
  %v1211 = vpop.f32.mrb[0].mxu0
  %1212 = vmatprep.mubr.bf16.mxu0 %v1081
  %1213 = vmatmul.mubr.bf16.gmra.mrb[0].mxu0 %v1080
  %v1214 = vpop.f32.mrb[0].mxu0
  %v1215 = vadd.f32 %v875, %v1214
  %v1216 = vpop.f32.mrb[0].mxu0
  %v1217 = vpop.f32.mrb[0].mxu0
  %v1218 = vadd.f32 %v880, %v1217
  %v1219 = vpop.f32.mrb[0].mxu0
  %1220 = vmatprep.mubr.bf16.mxu0 %v1083
  %1221 = vmatmul.mubr.bf16.gmra.mrb[0].mxu0 %v1082
  %v1222 = vpop.f32.mrb[0].mxu0
  %v1223 = vadd.f32 %v885, %v1222
  %v1224 = vpop.f32.mrb[0].mxu0
  %v1225 = vpop.f32.mrb[0].mxu0
  %v1226 = vadd.f32 %v890, %v1225
  %v1227 = vpop.f32.mrb[0].mxu0
  %1228 = vmatprep.mubr.bf16.mxu0 %v1085
  %1229 = vmatmul.mubr.bf16.gmra.mrb[0].mxu0 %v1084
  %v1230 = vpop.f32.mrb[0].mxu0
  %v1231 = vadd.f32 %v895, %v1230
  %v1232 = vpop.f32.mrb[0].mxu0
  %v1233 = vpop.f32.mrb[0].mxu0
  %v1234 = vadd.f32 %v900, %v1233
  %v1235 = vpop.f32.mrb[0].mxu0
  %1236 = vmatprep.mubr.bf16.mxu0 %v1087
  %1237 = vmatmul.mubr.bf16.gmra.mrb[0].mxu0 %v1086
  %v1238 = vpop.f32.mrb[0].mxu0
  %v1239 = vadd.f32 %v905, %v1238
  %v1240 = vpop.f32.mrb[0].mxu0
  %v1241 = vpop.f32.mrb[0].mxu0
  %v1242 = vadd.f32 %v910, %v1241
  %v1243 = vpop.f32.mrb[0].mxu0
  %1244 = vmatprep.mubr.bf16.mxu0 %v1089
  %1245 = vmatmul.mubr.bf16.gmra.mrb[0].mxu0 %v1088
  %v1246 = vpop.f32.mrb[0].mxu0
  %v1247 = vadd.f32 %v915, %v1246
  %v1248 = vpop.f32.mrb[0].mxu0
  %v1249 = vpop.f32.mrb[0].mxu0
  %v1250 = vadd.f32 %v920, %v1249
  %v1251 = vpop.f32.mrb[0].mxu0
  %1252 = vmatprep.mubr.bf16.mxu0 %v1091
  %1253 = vmatmul.mubr.bf16.gmra.mrb[0].mxu0 %v1090
  %v1254 = vpop.f32.mrb[0].mxu0
  %v1255 = vadd.f32 %v925, %v1254
  %v1256 = vpop.f32.mrb[0].mxu0
  %v1257 = vpop.f32.mrb[0].mxu0
  %v1258 = vadd.f32 %v930, %v1257
  %v1259 = vpop.f32.mrb[0].mxu0
  %1260 = vmatprep.mubr.bf16.mxu0 %v1093
  %1261 = vmatmul.mubr.bf16.gmra.mrb[0].mxu0 %v1092
  %v1262 = vpop.f32.mrb[0].mxu0
  %v1263 = vadd.f32 %v935, %v1262
  %v1264 = vpop.f32.mrb[0].mxu0
  %v1265 = vpop.f32.mrb[0].mxu0
  %v1266 = vadd.f32 %v940, %v1265
  %v1267 = vpop.f32.mrb[0].mxu0
  %1268 = vmatprep.mubr.bf16.mxu0 %v1095
  %1269 = vmatmul.mubr.bf16.gmra.mrb[0].mxu0 %v1094
  %v1270 = vpop.f32.mrb[0].mxu0
  %v1271 = vadd.f32 %v945, %v1270
  %v1272 = vpop.f32.mrb[0].mxu0
  %v1273 = vpop.f32.mrb[0].mxu0
  %v1274 = vadd.f32 %v950, %v1273
  %v1275 = vpop.f32.mrb[0].mxu0
  %1276 = vmatprep.mubr.bf16.mxu0 %v1097
  %1277 = vmatmul.mubr.bf16.gmra.mrb[0].mxu0 %v1096
  %v1278 = vpop.f32.mrb[0].mxu0
  %v1279 = vadd.f32 %v955, %v1278
  %v1280 = vpop.f32.mrb[0].mxu0
  %v1281 = vpop.f32.mrb[0].mxu0
  %v1282 = vadd.f32 %v960, %v1281
  %v1283 = vpop.f32.mrb[0].mxu0
  %1284 = vmatprep.mubr.bf16.mxu0 %v1099
  %1285 = vmatmul.mubr.bf16.gmra.mrb[0].mxu0 %v1098
  %v1286 = vpop.f32.mrb[0].mxu0
  %v1287 = vadd.f32 %v965, %v1286
  %v1288 = vpop.f32.mrb[0].mxu0
  %v1289 = vpop.f32.mrb[0].mxu0
  %v1290 = vadd.f32 %v970, %v1289
  %v1291 = vpop.f32.mrb[0].mxu0
  %1292 = vdwg.mxu0
  %v1293 = vmax.f32 %v1167, 0.0
  %v1294 = vmax.f32 %v1170, 0.0
  %v1295 = vmax.f32 %v1175, 0.0
  %v1296 = vmax.f32 %v1178, 0.0
  %v1297 = vmax.f32 %v1183, 0.0
  %v1298 = vmax.f32 %v1186, 0.0
  %v1299 = vmax.f32 %v1191, 0.0
  %v1300 = vmax.f32 %v1194, 0.0
  %v1301 = vmax.f32 %v1199, 0.0
  %v1302 = vmax.f32 %v1202, 0.0
  %v1303 = vmax.f32 %v1207, 0.0
  %v1304 = vmax.f32 %v1210, 0.0
  %v1305 = vmax.f32 %v1215, 0.0
  %v1306 = vmax.f32 %v1218, 0.0
  %v1307 = vmax.f32 %v1223, 0.0
  %v1308 = vmax.f32 %v1226, 0.0
  %v1309 = vmax.f32 %v1231, 0.0
  %v1310 = vmax.f32 %v1234, 0.0
  %v1311 = vmax.f32 %v1239, 0.0
  %v1312 = vmax.f32 %v1242, 0.0
  %v1313 = vmax.f32 %v1247, 0.0
  %v1314 = vmax.f32 %v1250, 0.0
  %v1315 = vmax.f32 %v1255, 0.0
  %v1316 = vmax.f32 %v1258, 0.0
  %v1317 = vmax.f32 %v1263, 0.0
  %v1318 = vmax.f32 %v1266, 0.0
  %v1319 = vmax.f32 %v1271, 0.0
  %v1320 = vmax.f32 %v1274, 0.0
  %v1321 = vmax.f32 %v1279, 0.0
  %v1322 = vmax.f32 %v1282, 0.0
  %v1323 = vmax.f32 %v1287, 0.0
  %v1324 = vmax.f32 %v1290, 0.0
  %v1325 = vpack.c.bf16 %v1294, %v1293
  %v1326 = vpack.c.bf16 %v1296, %v1295
  %v1327 = vpack.c.bf16 %v1298, %v1297
  %v1328 = vpack.c.bf16 %v1300, %v1299
  %v1329 = vpack.c.bf16 %v1302, %v1301
  %v1330 = vpack.c.bf16 %v1304, %v1303
  %v1331 = vpack.c.bf16 %v1306, %v1305
  %v1332 = vpack.c.bf16 %v1308, %v1307
  %v1333 = vpack.c.bf16 %v1310, %v1309
  %v1334 = vpack.c.bf16 %v1312, %v1311
  %v1335 = vpack.c.bf16 %v1314, %v1313
  %v1336 = vpack.c.bf16 %v1316, %v1315
  %v1337 = vpack.c.bf16 %v1318, %v1317
  %v1338 = vpack.c.bf16 %v1320, %v1319
  %v1339 = vpack.c.bf16 %v1322, %v1321
  %v1340 = vpack.c.bf16 %v1324, %v1323
  %v1341 = vld [vmem:[%s5] sm:$0xff]
  %v1342 = vld [vmem:[%s5 + $0x8] sm:$0xff]
  %v1343 = vld [vmem:[%s5 + $0x10] sm:$0xff]
  %v1344 = vld [vmem:[%s5 + $0x18] sm:$0xff]
  %v1345 = vld [vmem:[%s5 + $0x20] sm:$0xff]
  %v1346 = vld [vmem:[%s5 + $0x28] sm:$0xff]
  %v1347 = vld [vmem:[%s5 + $0x30] sm:$0xff]
  %v1348 = vld [vmem:[%s5 + $0x38] sm:$0xff]
  %v1349 = vld [vmem:[%s6] sm:$0xff]
  %v1350 = vld [vmem:[%s6 + $0x8] sm:$0xff]
  %v1351 = vld [vmem:[%s6 + $0x10] sm:$0xff]
  %v1352 = vld [vmem:[%s6 + $0x18] sm:$0xff]
  %v1353 = vld [vmem:[%s6 + $0x20] sm:$0xff]
  %v1354 = vld [vmem:[%s6 + $0x28] sm:$0xff]
  %v1355 = vld [vmem:[%s6 + $0x30] sm:$0xff]
  %v1356 = vld [vmem:[%s6 + $0x38] sm:$0xff]
  %1358 = vset.pattern.permute.xlu0 0
  %1359 = vperm.xlu0 %1358, %v1349
  %v1360 = vpop.permute.xlu0 %1359
  %1363 = vset.pattern.permute.xlu0 0
  %1364 = vperm.xlu0 %1363, %v1350
  %v1365 = vpop.permute.xlu0 %1364
  %1368 = vset.pattern.permute.xlu0 0
  %1369 = vperm.xlu0 %1368, %v1351
  %v1370 = vpop.permute.xlu0 %1369
  %1373 = vset.pattern.permute.xlu0 0
  %1374 = vperm.xlu0 %1373, %v1352
  %v1375 = vpop.permute.xlu0 %1374
  %1378 = vset.pattern.permute.xlu0 0
  %1379 = vperm.xlu0 %1378, %v1353
  %v1380 = vpop.permute.xlu0 %1379
  %1383 = vset.pattern.permute.xlu0 0
  %1384 = vperm.xlu0 %1383, %v1354
  %v1385 = vpop.permute.xlu0 %1384
  %1388 = vset.pattern.permute.xlu0 0
  %1389 = vperm.xlu0 %1388, %v1355
  %v1390 = vpop.permute.xlu0 %1389
  %1393 = vset.pattern.permute.xlu0 0
  %1394 = vperm.xlu0 %1393, %v1356
  %v1395 = vpop.permute.xlu0 %1394
  %v1405 = vunpack.c.l.b16 %v1341
  %v1406 = vunpack.c.h.b16 %v1341
  %v1407 = vunpack.c.l.b16 %v1342
  %v1408 = vunpack.c.h.b16 %v1342
  %v1409 = vunpack.c.l.b16 %v1343
  %v1410 = vunpack.c.h.b16 %v1343
  %v1411 = vunpack.c.l.b16 %v1344
  %v1412 = vunpack.c.h.b16 %v1344
  %v1413 = vunpack.c.l.b16 %v1345
  %v1414 = vunpack.c.h.b16 %v1345
  %v1415 = vunpack.c.l.b16 %v1346
  %v1416 = vunpack.c.h.b16 %v1346
  %v1417 = vunpack.c.l.b16 %v1347
  %v1418 = vunpack.c.h.b16 %v1347
  %v1419 = vunpack.c.l.b16 %v1348
  %v1420 = vunpack.c.h.b16 %v1348
  %v1421 = vpack.c.b16 %v1407, %v1405
  %v1422 = vpack.c.b16 %v1408, %v1406
  %v1423 = vpack.c.b16 %v1411, %v1409
  %v1424 = vpack.c.b16 %v1412, %v1410
  %v1425 = vpack.c.b16 %v1415, %v1413
  %v1426 = vpack.c.b16 %v1416, %v1414
  %v1427 = vpack.c.b16 %v1419, %v1417
  %v1428 = vpack.c.b16 %v1420, %v1418
  %1437 = vmatprep.subr.bf16.mxu0 0
  %1438 = vmatpush1.bf16.msra.mxu0 %v1325
  %1439 = vmatprep.subr.bf16.mxu0 0
  %1440 = vmatpush1.bf16.msra.mxu0 %v1326
  %1441 = vmatprep.subr.bf16.mxu0 0
  %1442 = vmatpush1.bf16.msra.mxu0 %v1327
  %1443 = vmatprep.subr.bf16.mxu0 0
  %1444 = vmatpush1.bf16.msra.mxu0 %v1328
  %1445 = vmatprep.subr.bf16.mxu0 0
  %1446 = vmatpush1.bf16.msra.mxu0 %v1329
  %1447 = vmatprep.subr.bf16.mxu0 0
  %1448 = vmatpush1.bf16.msra.mxu0 %v1330
  %1449 = vmatprep.subr.bf16.mxu0 0
  %1450 = vmatpush1.bf16.msra.mxu0 %v1331
  %1451 = vmatprep.subr.bf16.mxu0 0
  %1452 = vmatpush1.bf16.msra.mxu0 %v1332
  %1453 = vmatprep.subr.bf16.mxu0 0
  %1454 = vmatpush1.bf16.msra.mxu0 %v1333
  %1455 = vmatprep.subr.bf16.mxu0 0
  %1456 = vmatpush1.bf16.msra.mxu0 %v1334
  %1457 = vmatprep.subr.bf16.mxu0 0
  %1458 = vmatpush1.bf16.msra.mxu0 %v1335
  %1459 = vmatprep.subr.bf16.mxu0 0
  %1460 = vmatpush1.bf16.msra.mxu0 %v1336
  %1461 = vmatprep.subr.bf16.mxu0 0
  %1462 = vmatpush1.bf16.msra.mxu0 %v1337
  %1463 = vmatprep.subr.bf16.mxu0 0
  %1464 = vmatpush1.bf16.msra.mxu0 %v1338
  %1465 = vmatprep.subr.bf16.mxu0 0
  %1466 = vmatpush1.bf16.msra.mxu0 %v1339
  %1467 = vmatprep.subr.bf16.mxu0 0
  %1468 = vmatpush1.bf16.msra.mxu0 %v1340
  %1469 = vmatprep.mubr.bf16.mxu0 %v1422
  %1470 = vmatmul.mubr.bf16.gmra.mrb[0].mxu0 %v1421
  %v1471 = vpop.f32.mrb[0].mxu0
  %v1472 = vadd.f32 %v1360, %v1471
  %v1473 = vpop.f32.mrb[0].mxu0
  %v1474 = vpop.f32.mrb[0].mxu0
  %v1475 = vadd.f32 %v1365, %v1474
  %v1476 = vpop.f32.mrb[0].mxu0
  %1477 = vmatprep.mubr.bf16.mxu0 %v1424
  %1478 = vmatmul.mubr.bf16.gmra.mrb[0].mxu0 %v1423
  %v1479 = vpop.f32.mrb[0].mxu0
  %v1480 = vadd.f32 %v1370, %v1479
  %v1481 = vpop.f32.mrb[0].mxu0
  %v1482 = vpop.f32.mrb[0].mxu0
  %v1483 = vadd.f32 %v1375, %v1482
  %v1484 = vpop.f32.mrb[0].mxu0
  %1485 = vmatprep.mubr.bf16.mxu0 %v1426
  %1486 = vmatmul.mubr.bf16.gmra.mrb[0].mxu0 %v1425
  %v1487 = vpop.f32.mrb[0].mxu0
  %v1488 = vadd.f32 %v1380, %v1487
  %v1489 = vpop.f32.mrb[0].mxu0
  %v1490 = vpop.f32.mrb[0].mxu0
  %v1491 = vadd.f32 %v1385, %v1490
  %v1492 = vpop.f32.mrb[0].mxu0
  %1493 = vmatprep.mubr.bf16.mxu0 %v1428
  %1494 = vmatmul.mubr.bf16.gmra.mrb[0].mxu0 %v1427
  %v1495 = vpop.f32.mrb[0].mxu0
  %v1496 = vadd.f32 %v1390, %v1495
  %v1497 = vpop.f32.mrb[0].mxu0
  %v1498 = vpop.f32.mrb[0].mxu0
  %v1499 = vadd.f32 %v1395, %v1498
  %v1500 = vpop.f32.mrb[0].mxu0
  %1501 = vdwg.mxu0
  %v1502 = vrot.slane %v1472, 4
  %v1503 = vmax.f32 %v1472, %v1502
  %v1504 = vrot.slane %v1503, 2
  %v1505 = vmax.f32 %v1503, %v1504
  %v1506 = vrot.slane %v1505, 1
  %v1507 = vmax.f32 %v1505, %v1506
  %v1508 = vrot.slane %v1475, 4
  %v1509 = vmax.f32 %v1475, %v1508
  %v1510 = vrot.slane %v1509, 2
  %v1511 = vmax.f32 %v1509, %v1510
  %v1512 = vrot.slane %v1511, 1
  %v1513 = vmax.f32 %v1511, %v1512
  %v1514 = vrot.slane %v1480, 4
  %v1515 = vmax.f32 %v1480, %v1514
  %v1516 = vrot.slane %v1515, 2
  %v1517 = vmax.f32 %v1515, %v1516
  %v1518 = vrot.slane %v1517, 1
  %v1519 = vmax.f32 %v1517, %v1518
  %v1520 = vrot.slane %v1483, 4
  %v1521 = vmax.f32 %v1483, %v1520
  %v1522 = vrot.slane %v1521, 2
  %v1523 = vmax.f32 %v1521, %v1522
  %v1524 = vrot.slane %v1523, 1
  %v1525 = vmax.f32 %v1523, %v1524
  %v1526 = vrot.slane %v1488, 4
  %v1527 = vmax.f32 %v1488, %v1526
  %v1528 = vrot.slane %v1527, 2
  %v1529 = vmax.f32 %v1527, %v1528
  %v1530 = vrot.slane %v1529, 1
  %v1531 = vmax.f32 %v1529, %v1530
  %v1532 = vrot.slane %v1491, 4
  %v1533 = vmax.f32 %v1491, %v1532
  %v1534 = vrot.slane %v1533, 2
  %v1535 = vmax.f32 %v1533, %v1534
  %v1536 = vrot.slane %v1535, 1
  %v1537 = vmax.f32 %v1535, %v1536
  %v1538 = vrot.slane %v1496, 4
  %v1539 = vmax.f32 %v1496, %v1538
  %v1540 = vrot.slane %v1539, 2
  %v1541 = vmax.f32 %v1539, %v1540
  %v1542 = vrot.slane %v1541, 1
  %v1543 = vmax.f32 %v1541, %v1542
  %v1544 = vrot.slane %v1499, 4
  %v1545 = vmax.f32 %v1499, %v1544
  %v1546 = vrot.slane %v1545, 2
  %v1547 = vmax.f32 %v1545, %v1546
  %v1548 = vrot.slane %v1547, 1
  %v1549 = vmax.f32 %v1547, %v1548
  %v1550 = vsub.f32 %v1472, %v1507
  %v1551 = vsub.f32 %v1475, %v1513
  %v1552 = vsub.f32 %v1480, %v1519
  %v1553 = vsub.f32 %v1483, %v1525
  %v1554 = vsub.f32 %v1488, %v1531
  %v1555 = vsub.f32 %v1491, %v1537
  %v1556 = vsub.f32 %v1496, %v1543
  %v1557 = vsub.f32 %v1499, %v1549
  %v1558 = vmul.f32 %v1550, 1.442695
  %v1559 = vpow.pop %v1558
  %v1560 = vmul.f32 %v1551, 1.442695
  %v1561 = vpow.pop %v1560
  %v1562 = vmul.f32 %v1552, 1.442695
  %v1563 = vpow.pop %v1562
  %v1564 = vmul.f32 %v1553, 1.442695
  %v1565 = vpow.pop %v1564
  %v1566 = vmul.f32 %v1554, 1.442695
  %v1567 = vpow.pop %v1566
  %v1568 = vmul.f32 %v1555, 1.442695
  %v1569 = vpow.pop %v1568
  %v1570 = vmul.f32 %v1556, 1.442695
  %v1571 = vpow.pop %v1570
  %v1572 = vmul.f32 %v1557, 1.442695
  %v1573 = vpow.pop %v1572
  %v1574 = vrot.slane %v1559, 4
  %v1575 = vadd.f32 %v1559, %v1574
  %v1576 = vrot.slane %v1575, 2
  %v1577 = vadd.f32 %v1575, %v1576
  %v1578 = vrot.slane %v1577, 1
  %v1579 = vadd.f32 %v1577, %v1578
  %v1580 = vrot.slane %v1561, 4
  %v1581 = vadd.f32 %v1561, %v1580
  %v1582 = vrot.slane %v1581, 2
  %v1583 = vadd.f32 %v1581, %v1582
  %v1584 = vrot.slane %v1583, 1
  %v1585 = vadd.f32 %v1583, %v1584
  %v1586 = vrot.slane %v1563, 4
  %v1587 = vadd.f32 %v1563, %v1586
  %v1588 = vrot.slane %v1587, 2
  %v1589 = vadd.f32 %v1587, %v1588
  %v1590 = vrot.slane %v1589, 1
  %v1591 = vadd.f32 %v1589, %v1590
  %v1592 = vrot.slane %v1565, 4
  %v1593 = vadd.f32 %v1565, %v1592
  %v1594 = vrot.slane %v1593, 2
  %v1595 = vadd.f32 %v1593, %v1594
  %v1596 = vrot.slane %v1595, 1
  %v1597 = vadd.f32 %v1595, %v1596
  %v1598 = vrot.slane %v1567, 4
  %v1599 = vadd.f32 %v1567, %v1598
  %v1600 = vrot.slane %v1599, 2
  %v1601 = vadd.f32 %v1599, %v1600
  %v1602 = vrot.slane %v1601, 1
  %v1603 = vadd.f32 %v1601, %v1602
  %v1604 = vrot.slane %v1569, 4
  %v1605 = vadd.f32 %v1569, %v1604
  %v1606 = vrot.slane %v1605, 2
  %v1607 = vadd.f32 %v1605, %v1606
  %v1608 = vrot.slane %v1607, 1
  %v1609 = vadd.f32 %v1607, %v1608
  %v1610 = vrot.slane %v1571, 4
  %v1611 = vadd.f32 %v1571, %v1610
  %v1612 = vrot.slane %v1611, 2
  %v1613 = vadd.f32 %v1611, %v1612
  %v1614 = vrot.slane %v1613, 1
  %v1615 = vadd.f32 %v1613, %v1614
  %v1616 = vrot.slane %v1573, 4
  %v1617 = vadd.f32 %v1573, %v1616
  %v1618 = vrot.slane %v1617, 2
  %v1619 = vadd.f32 %v1617, %v1618
  %v1620 = vrot.slane %v1619, 1
  %v1621 = vadd.f32 %v1619, %v1620
  %v1622 = vlog2.pop %v1579
  %v1623 = vmul.f32 %v1622, 0.6931472
  %v1624 = vlog2.pop %v1585
  %v1625 = vmul.f32 %v1624, 0.6931472
  %v1626 = vlog2.pop %v1591
  %v1627 = vmul.f32 %v1626, 0.6931472
  %v1628 = vlog2.pop %v1597
  %v1629 = vmul.f32 %v1628, 0.6931472
  %v1630 = vlog2.pop %v1603
  %v1631 = vmul.f32 %v1630, 0.6931472
  %v1632 = vlog2.pop %v1609
  %v1633 = vmul.f32 %v1632, 0.6931472
  %v1634 = vlog2.pop %v1615
  %v1635 = vmul.f32 %v1634, 0.6931472
  %v1636 = vlog2.pop %v1621
  %v1637 = vmul.f32 %v1636, 0.6931472
  %v1638 = vsub.f32 %v1550, %v1623
  %v1639 = vsub.f32 %v1551, %v1625
  %v1640 = vsub.f32 %v1552, %v1627
  %v1641 = vsub.f32 %v1553, %v1629
  %v1642 = vsub.f32 %v1554, %v1631
  %v1643 = vsub.f32 %v1555, %v1633
  %v1644 = vsub.f32 %v1556, %v1635
  %v1645 = vsub.f32 %v1557, %v1637
  %1646 = vst [vmem:[%s7] sm:$0xff] %v1638
  %1647 = vst [vmem:[%s7 + $0x8] sm:$0xff] %v1639
  %1648 = vst [vmem:[%s7 + $0x10] sm:$0xff] %v1640
  %1649 = vst [vmem:[%s7 + $0x18] sm:$0xff] %v1641
  %1650 = vst [vmem:[%s7 + $0x20] sm:$0xff] %v1642
  %1651 = vst [vmem:[%s7 + $0x28] sm:$0xff] %v1643
  %1652 = vst [vmem:[%s7 + $0x30] sm:$0xff] %v1644
  %1653 = vst [vmem:[%s7 + $0x38] sm:$0xff] %v1645
  // Predicated region
  $region30: #{relation_classifier_forward.1} parent=0 // pred_check
    _
  $region31: #{relation_classifier_forward.1} parent=0 // pred_check_branch
    %1655 = sbr.rel (0) target = $region33
  $region32: #{relation_classifier_forward.1} parent=0 // pred_region
    _
  $region33: #{relation_classifier_forward.1} parent=0 // pred_fallthru
    _
  // Predicated region
  $region34: #{relation_classifier_forward.1} parent=0 // pred_check
    _
  $region35: #{relation_classifier_forward.1} parent=0 // pred_check_branch
    %1657 = sbr.rel (0) target = $region37
  $region36: #{relation_classifier_forward.1} parent=0 // pred_region
    _
  $region37: #{relation_classifier_forward.1} parent=0 // pred_fallthru
    _

</llo_original>
